<compile_context>
chip_gen: v7x
topology: tpu7x:2x2x1
jax: 0.10.0
libtpu: 0.0.40
codegen_flags: <defaults>
</compile_context>

<pallas_src>
import math

import numpy as np
import jax
import jax.numpy as jnp
from jax.experimental import pallas as pl
from jax.experimental.pallas import tpu as pltpu  # noqa: F401  (kept for TPU-specific extensions)

# ----------------------------- config ---------------------------------------
VOCAB = 64        # SimpleLLMConfig.vocab_size (synthetic)
SEQ   = 8         # sequence length of the example inputs (power of two)
EMBED = 32        # SimpleLLMConfig.embed_dim
FF    = 64        # MLP hidden dim
BATCH = 2

assert SEQ & (SEQ - 1) == 0, "SEQ must be a power of two for the shift-based masks"

# ---- weight-slab row layout (bf16, EMBED columns; offsets 16-aligned) -------
_EROWS   = ((VOCAB + SEQ + 15) // 16) * 16   # [tok_emb ; pos_emb ; zero-pad] region
_OFF_WQ  = _EROWS
_OFF_WK  = _OFF_WQ + EMBED
_OFF_WV  = _OFF_WK + EMBED
_OFF_WO  = _OFF_WV + EMBED
_OFF_W1T = _OFF_WO + EMBED                   # w1 stored transposed: (FF, EMBED)
_OFF_W2  = _OFF_W1T + FF
_W_ROWS  = _OFF_W2 + FF

# ---- small-param slab row layout (f32, max(EMBED, FF) columns) ---------------
_P_WIDTH = max(EMBED, FF)
(_ROW_LN1G, _ROW_LN1B, _ROW_LN2G, _ROW_LN2B, _ROW_LNFG, _ROW_LNFB,
 _ROW_B2, _ROW_WH, _ROW_B1, _ROW_BH) = range(10)
_P_ROWS = 10


# ----------------------------- kernel ---------------------------------------
def _reward_kernel(ids_ref, w_ref, p_ref, o_ref):
    """ids_ref: (TOK,1) int32; w_ref: (_W_ROWS, D) bf16; p_ref: (_P_ROWS, _P_WIDTH) f32;
    o_ref: (1, BT) f32 rewards (lane-dense)."""
    TOK = ids_ref.shape[0]
    BT = o_ref.shape[1]
    D, F, V, S = EMBED, FF, VOCAB, SEQ
    inv_sqrt_d = 1.0 / math.sqrt(D)
    shift = int(math.log2(S))

    def layernorm(h, g, b):
        # single-pass stats: E[x] and E[x^2] are independent reductions
        mu = jnp.mean(h, axis=-1, keepdims=True)
        m2 = jnp.mean(h * h, axis=-1, keepdims=True)
        var = m2 - mu * mu
        return (h - mu) * jax.lax.rsqrt(var + 1e-5) * g + b

    # ---- fused token + position embedding: one-hot over [tok_emb ; pos_emb] ----
    ids = ids_ref[...]                                              # (TOK, 1) int32
    vi = jax.lax.broadcasted_iota(jnp.int32, (TOK, _EROWS), 1)      # augmented-vocab index
    ti = jax.lax.broadcasted_iota(jnp.int32, (TOK, _EROWS), 0)      # flat token index
    hit = (vi == ids) | (vi == V + (ti & (S - 1)))                  # token row OR position row
    onehot = jnp.where(hit, 1.0, 0.0).astype(jnp.bfloat16)          # (TOK, _EROWS)
    x = jnp.dot(onehot, w_ref[0:_EROWS, :],
                preferred_element_type=jnp.float32)                 # (TOK, D) f32

    # ---- pre-LN causal single-head self-attention, residual ----
    h = layernorm(x, p_ref[_ROW_LN1G:_ROW_LN1G + 1, 0:D],
                  p_ref[_ROW_LN1B:_ROW_LN1B + 1, 0:D])
    hb = h.astype(jnp.bfloat16)
    q = jnp.dot(hb, w_ref[_OFF_WQ:_OFF_WQ + D, :], preferred_element_type=jnp.float32)
    k = jnp.dot(hb, w_ref[_OFF_WK:_OFF_WK + D, :], preferred_element_type=jnp.float32)
    v = jnp.dot(hb, w_ref[_OFF_WV:_OFF_WV + D, :], preferred_element_type=jnp.float32)

    scores = jax.lax.dot_general(
        q.astype(jnp.bfloat16), k.astype(jnp.bfloat16),
        (((1,), (1,)), ((), ())), preferred_element_type=jnp.float32) * inv_sqrt_d

    # block-diagonal causal mask, built in-register (no HBM constant)
    ri = jax.lax.broadcasted_iota(jnp.int32, (TOK, TOK), 0)
    ci = jax.lax.broadcasted_iota(jnp.int32, (TOK, TOK), 1)
    allowed = jnp.logical_and(ci <= ri, (ri >> shift) == (ci >> shift))
    scores = jnp.where(allowed, scores, -1e30)
    scores = scores - jnp.max(scores, axis=-1, keepdims=True)
    p = jnp.exp(scores)
    p = p * pl.reciprocal(jnp.sum(p, axis=-1, keepdims=True), approx=True)

    attn = jnp.dot(p.astype(jnp.bfloat16), v.astype(jnp.bfloat16),
                   preferred_element_type=jnp.float32)
    x = x + jnp.dot(attn.astype(jnp.bfloat16), w_ref[_OFF_WO:_OFF_WO + D, :],
                    preferred_element_type=jnp.float32)

    # ---- pre-LN MLP (tanh-approx GELU), residual ----
    h2 = layernorm(x, p_ref[_ROW_LN2G:_ROW_LN2G + 1, 0:D],
                   p_ref[_ROW_LN2B:_ROW_LN2B + 1, 0:D]).astype(jnp.bfloat16)
    m = jax.lax.dot_general(
        h2, w_ref[_OFF_W1T:_OFF_W1T + F, :], (((1,), (1,)), ((), ())),
        preferred_element_type=jnp.float32) + p_ref[_ROW_B1:_ROW_B1 + 1, 0:F]
    m = 0.5 * m * (1.0 + jnp.tanh(0.7978845608028654 * (m + 0.044715 * m * m * m)))
    x = (x
         + jnp.dot(m.astype(jnp.bfloat16), w_ref[_OFF_W2:_OFF_W2 + F, :],
                   preferred_element_type=jnp.float32)
         + p_ref[_ROW_B2:_ROW_B2 + 1, 0:D])

    # ---- last-token pooling (exact f32 selection), final LN, head, tanh ----
    si = jax.lax.broadcasted_iota(jnp.int32, (BT, TOK), 0)
    tj = jax.lax.broadcasted_iota(jnp.int32, (BT, TOK), 1)
    sel = jnp.where(tj == si * S + (S - 1), 1.0, 0.0)               # (BT, TOK) f32
    pooled = jnp.dot(sel, x, preferred_element_type=jnp.float32)    # (BT, D)
    hf = layernorm(pooled, p_ref[_ROW_LNFG:_ROW_LNFG + 1, 0:D],
                   p_ref[_ROW_LNFB:_ROW_LNFB + 1, 0:D])
    # head as wh @ hf^T -> directly lane-dense (1, BT)
    r = jax.lax.dot_general(
        p_ref[_ROW_WH:_ROW_WH + 1, 0:D], hf, (((1,), (1,)), ((), ())),
        preferred_element_type=jnp.float32)
    o_ref[...] = jnp.tanh(r + p_ref[_ROW_BH:_ROW_BH + 1, 0:1])


# ----------------------------- wrapper ---------------------------------------
def _pallas_rewards(ids_all, w_slab, p_slab):
    """SimpleLLMForClassification.forward over a stacked (BT, S) id batch -> (1, BT)."""
    BT, S = ids_all.shape
    TOK = BT * S
    D, F = EMBED, FF
    ids_col = ids_all.reshape(TOK, 1).astype(jnp.int32)

    flops = int(2 * TOK * _EROWS * D          # fused embedding matmul
                + 4 * 2 * TOK * D * D         # q, k, v, o projections
                + 2 * 2 * TOK * TOK * D       # scores + p@v
                + 2 * 2 * TOK * D * F         # MLP
                + 2 * BT * TOK * D            # last-token pooling
                + 2 * BT * D                  # head
                + 30 * TOK * D)               # elementwise / LN slack
    transcendentals = int(TOK * TOK + TOK * F + 3 * TOK + BT)
    bytes_accessed = int(ids_col.size * 4 + w_slab.size * 2 + p_slab.size * 4 + BT * 4)

    # Single invocation (no grid): everything fits in VMEM, nothing to pipeline.
    return pl.pallas_call(
        _reward_kernel,
        out_shape=jax.ShapeDtypeStruct((1, BT), jnp.float32),
        cost_estimate=pl.CostEstimate(flops=flops,
                                      transcendentals=transcendentals,
                                      bytes_accessed=bytes_accessed),
    )(ids_col, w_slab, p_slab)


@jax.jit
def reward_model_forward(input_ids_chosen, input_ids_rejected, w_slab, p_slab):
    """RewardModel.forward: one fused Pallas call over chosen++rejected."""
    ids_all = jnp.concatenate([input_ids_chosen, input_ids_rejected], axis=0)  # (2B, S)
    rewards = _pallas_rewards(ids_all, w_slab, p_slab)                         # (1, 2B)
    B = input_ids_chosen.shape[0]
    r = rewards.reshape(2 * B, 1)
    return r[:B], r[B:]


# ----------------------------- params ----------------------------------------
def init_params(key):
    D, F, V, S = EMBED, FF, VOCAB, SEQ
    ks = jax.random.split(key, 10)
    n = lambda k, shape, scale=0.02: (scale * jax.random.normal(k, shape)).astype(jnp.float32)
    return {
        "tok_emb": n(ks[0], (V, D)),
        "pos_emb": n(ks[1], (S, D)),
        "wq": n(ks[2], (D, D)), "wk": n(ks[3], (D, D)),
        "wv": n(ks[4], (D, D)), "wo": n(ks[5], (D, D)),
        "ln1_g": jnp.ones((D,), jnp.float32), "ln1_b": jnp.zeros((D,), jnp.float32),
        "ln2_g": jnp.ones((D,), jnp.float32), "ln2_b": jnp.zeros((D,), jnp.float32),
        "lnf_g": jnp.ones((D,), jnp.float32), "lnf_b": jnp.zeros((D,), jnp.float32),
        "w1": n(ks[6], (D, F)), "b1": jnp.zeros((F,), jnp.float32),
        "w2": n(ks[7], (F, D)), "b2": jnp.zeros((D,), jnp.float32),
        "wh": n(ks[8], (D,)), "bh": jnp.zeros((1,), jnp.float32),
    }


def pack_params(params):
    """Pack the logical parameters into two contiguous slabs (done once, off the hot path)."""
    D, V, S = EMBED, VOCAB, SEQ
    pad = jnp.zeros((_EROWS - V - S, D), jnp.float32)
    w_slab = jnp.concatenate(
        [params["tok_emb"], params["pos_emb"], pad,
         params["wq"], params["wk"], params["wv"], params["wo"],
         params["w1"].T, params["w2"]], axis=0).astype(jnp.bfloat16)
    assert w_slab.shape == (_W_ROWS, D)

    def row(v):
        v = jnp.asarray(v, jnp.float32).reshape(1, -1)
        return jnp.pad(v, ((0, 0), (0, _P_WIDTH - v.shape[1])))

    p_slab = jnp.concatenate(
        [row(params["ln1_g"]), row(params["ln1_b"]),
         row(params["ln2_g"]), row(params["ln2_b"]),
         row(params["lnf_g"]), row(params["lnf_b"]),
         row(params["b2"]), row(params["wh"]),
         row(params["b1"]), row(params["bh"])], axis=0)
    assert p_slab.shape == (_P_ROWS, _P_WIDTH)
    return w_slab, p_slab


# ----------------------------- pure-JAX reference -----------------------------
def _reference_rewards(ids_all, params):
    D = EMBED
    x = params["tok_emb"][ids_all] + params["pos_emb"][None, :, :]        # (BT, S, D)

    def ln(h, g, b):
        mu = jnp.mean(h, -1, keepdims=True)
        var = jnp.mean((h - mu) ** 2, -1, keepdims=True)
        return (h - mu) / jnp.sqrt(var + 1e-5) * g + b

    h = ln(x, params["ln1_g"], params["ln1_b"])
    q, k, v = h @ params["wq"], h @ params["wk"], h @ params["wv"]
    s = jnp.einsum("bqd,bkd->bqk", q, k) / math.sqrt(D)
    S = ids_all.shape[1]
    s = jnp.where(jnp.tril(jnp.ones((S, S), bool))[None], s, -1e30)
    p = jax.nn.softmax(s, axis=-1)
    x = x + jnp.einsum("bqk,bkd->bqd", p, v) @ params["wo"]
    h = ln(x, params["ln2_g"], params["ln2_b"])
    m = h @ params["w1"] + params["b1"]
    m = 0.5 * m * (1.0 + jnp.tanh(0.7978845608028654 * (m + 0.044715 * m ** 3)))
    x = x + m @ params["w2"] + params["b2"]
    pooled = x[:, -1]
    hf = ln(pooled, params["lnf_g"], params["lnf_b"])
    return jnp.tanh(hf @ params["wh"][:, None] + params["bh"])            # (BT, 1)


# ----------------------------- main -------------------------------------------
if __name__ == "__main__":
    key = jax.random.PRNGKey(0)
    k_params, k_c, k_r = jax.random.split(key, 3)

    params = init_params(k_params)
    w_slab, p_slab = pack_params(params)

    input_ids_chosen = jax.random.randint(k_c, (BATCH, SEQ), 0, VOCAB, dtype=jnp.int32)
    input_ids_rejected = jax.random.randint(k_r, (BATCH, SEQ), 0, VOCAB, dtype=jnp.int32)

    r_chosen, r_rejected = reward_model_forward(
        input_ids_chosen, input_ids_rejected, w_slab, p_slab)
    jax.block_until_ready((r_chosen, r_rejected))

    assert r_chosen.shape == (BATCH, 1) and r_rejected.shape == (BATCH, 1)
    assert bool(jnp.all(jnp.isfinite(r_chosen))) and bool(jnp.all(jnp.isfinite(r_rejected)))

    # correctness vs. the f32 pure-JAX reference (bf16 MXU + approx recip => loose tol)
    ref = _reference_rewards(jnp.concatenate([input_ids_chosen, input_ids_rejected], 0), params)
    got = jnp.concatenate([r_chosen, r_rejected], 0)
    np.testing.assert_allclose(np.asarray(got), np.asarray(ref), atol=3e-2, rtol=0)

    print("KERNEL_OK")
</pallas_src>

<mosaic_0001>
module attributes {stable_mosaic.version = 11 : i64} {
  func.func @_reward_kernel(%arg0: memref<32x1xi32, #tpu.memory_space<vmem>>, %arg1: memref<336x32xbf16, #tpu.memory_space<vmem>>, %arg2: memref<10x64xf32, #tpu.memory_space<vmem>>, %arg3: memref<1x4xf32, #tpu.memory_space<vmem>>) attributes {dimension_semantics = [], scalar_prefetch = 0 : i64, scratch_operands = 0 : i64, tpu.core_type = #tpu.core_type<tc>} {
    %c0 = arith.constant 0 : index
    %c0_0 = arith.constant 0 : index
    %0 = vector.load %arg0[%c0, %c0_0] : memref<32x1xi32, #tpu.memory_space<vmem>>, vector<32x1xi32>
    %1 = tpu.iota {dimensions = array<i32: 1>} : vector<32x80xi32>
    %2 = tpu.iota {dimensions = array<i32: 0>} : vector<32x80xi32>
    %3 = vector.broadcast %0 : vector<32x1xi32> to vector<32x80xi32>
    %4 = arith.cmpi eq, %1, %3 : vector<32x80xi32>
    %c7_i32 = arith.constant 7 : i32
    %5 = vector.broadcast %c7_i32 : i32 to vector<32x80xi32>
    %6 = arith.andi %2, %5 : vector<32x80xi32>
    %c64_i32 = arith.constant 64 : i32
    %7 = vector.broadcast %c64_i32 : i32 to vector<32x80xi32>
    %8 = arith.addi %7, %6 : vector<32x80xi32>
    %9 = arith.cmpi eq, %1, %8 : vector<32x80xi32>
    %10 = arith.ori %4, %9 : vector<32x80xi1>
    %cst = arith.constant 1.000000e+00 : f32
    %cst_1 = arith.constant 0.000000e+00 : f32
    %11 = vector.broadcast %cst : f32 to vector<32x80xf32>
    %12 = vector.broadcast %cst_1 : f32 to vector<32x80xf32>
    %13 = arith.select %10, %11, %12 : vector<32x80xi1>, vector<32x80xf32>
    %14 = arith.truncf %13 : vector<32x80xf32> to vector<32x80xbf16>
    %c0_2 = arith.constant 0 : index
    %c0_3 = arith.constant 0 : index
    %15 = vector.load %arg1[%c0_2, %c0_3] : memref<336x32xbf16, #tpu.memory_space<vmem>>, vector<80x32xbf16>
    %cst_4 = arith.constant dense<0.000000e+00> : vector<32x32xf32>
    %16 = tpu.matmul %14, %15, %cst_4 {dimension_numbers = #tpu.dot_dimension_numbers<[1], [0], [0], [1], [0, 0, 1, 1], [], []>} : vector<32x80xbf16>, vector<80x32xbf16>, vector<32x32xf32> -> vector<32x32xf32>
    %c0_5 = arith.constant 0 : index
    %c0_6 = arith.constant 0 : index
    %17 = vector.load %arg2[%c0_5, %c0_6] : memref<10x64xf32, #tpu.memory_space<vmem>>, vector<1x32xf32>
    %c1 = arith.constant 1 : index
    %c0_7 = arith.constant 0 : index
    %18 = vector.load %arg2[%c1, %c0_7] : memref<10x64xf32, #tpu.memory_space<vmem>>, vector<1x32xf32>
    %cst_8 = arith.constant dense<0.000000e+00> : vector<32xf32>
    %19 = vector.multi_reduction <add>, %16, %cst_8 [1] : vector<32x32xf32> to vector<32xf32>
    %20 = vector.shape_cast %19 : vector<32xf32> to vector<32x1xf32>
    %cst_9 = arith.constant 3.200000e+01 : f32
    %21 = vector.broadcast %cst_9 : f32 to vector<32x1xf32>
    %22 = arith.divf %20, %21 : vector<32x1xf32>
    %23 = arith.mulf %16, %16 : vector<32x32xf32>
    %cst_10 = arith.constant dense<0.000000e+00> : vector<32xf32>
    %24 = vector.multi_reduction <add>, %23, %cst_10 [1] : vector<32x32xf32> to vector<32xf32>
    %25 = vector.shape_cast %24 : vector<32xf32> to vector<32x1xf32>
    %cst_11 = arith.constant 3.200000e+01 : f32
    %26 = vector.broadcast %cst_11 : f32 to vector<32x1xf32>
    %27 = arith.divf %25, %26 : vector<32x1xf32>
    %28 = arith.mulf %22, %22 : vector<32x1xf32>
    %29 = arith.subf %27, %28 : vector<32x1xf32>
    %30 = vector.broadcast %22 : vector<32x1xf32> to vector<32x32xf32>
    %31 = arith.subf %16, %30 : vector<32x32xf32>
    %cst_12 = arith.constant 9.99999974E-6 : f32
    %32 = vector.broadcast %cst_12 : f32 to vector<32x1xf32>
    %33 = arith.addf %29, %32 : vector<32x1xf32>
    %34 = math.rsqrt %33 : vector<32x1xf32>
    %35 = vector.broadcast %34 : vector<32x1xf32> to vector<32x32xf32>
    %36 = arith.mulf %31, %35 : vector<32x32xf32>
    %37 = vector.broadcast %17 : vector<1x32xf32> to vector<32x32xf32>
    %38 = arith.mulf %36, %37 : vector<32x32xf32>
    %39 = vector.broadcast %18 : vector<1x32xf32> to vector<32x32xf32>
    %40 = arith.addf %38, %39 : vector<32x32xf32>
    %41 = arith.truncf %40 : vector<32x32xf32> to vector<32x32xbf16>
    %c80 = arith.constant 80 : index
    %c0_13 = arith.constant 0 : index
    %42 = vector.load %arg1[%c80, %c0_13] : memref<336x32xbf16, #tpu.memory_space<vmem>>, vector<32x32xbf16>
    %cst_14 = arith.constant dense<0.000000e+00> : vector<32x32xf32>
    %43 = tpu.matmul %41, %42, %cst_14 {dimension_numbers = #tpu.dot_dimension_numbers<[1], [0], [0], [1], [0, 0, 1, 1], [], []>} : vector<32x32xbf16>, vector<32x32xbf16>, vector<32x32xf32> -> vector<32x32xf32>
    %c112 = arith.constant 112 : index
    %c0_15 = arith.constant 0 : index
    %44 = vector.load %arg1[%c112, %c0_15] : memref<336x32xbf16, #tpu.memory_space<vmem>>, vector<32x32xbf16>
    %cst_16 = arith.constant dense<0.000000e+00> : vector<32x32xf32>
    %45 = tpu.matmul %41, %44, %cst_16 {dimension_numbers = #tpu.dot_dimension_numbers<[1], [0], [0], [1], [0, 0, 1, 1], [], []>} : vector<32x32xbf16>, vector<32x32xbf16>, vector<32x32xf32> -> vector<32x32xf32>
    %c144 = arith.constant 144 : index
    %c0_17 = arith.constant 0 : index
    %46 = vector.load %arg1[%c144, %c0_17] : memref<336x32xbf16, #tpu.memory_space<vmem>>, vector<32x32xbf16>
    %cst_18 = arith.constant dense<0.000000e+00> : vector<32x32xf32>
    %47 = tpu.matmul %41, %46, %cst_18 {dimension_numbers = #tpu.dot_dimension_numbers<[1], [0], [0], [1], [0, 0, 1, 1], [], []>} : vector<32x32xbf16>, vector<32x32xbf16>, vector<32x32xf32> -> vector<32x32xf32>
    %48 = arith.truncf %43 : vector<32x32xf32> to vector<32x32xbf16>
    %49 = arith.truncf %45 : vector<32x32xf32> to vector<32x32xbf16>
    %cst_19 = arith.constant dense<0.000000e+00> : vector<32x32xf32>
    %50 = tpu.matmul %48, %49, %cst_19 {dimension_numbers = #tpu.dot_dimension_numbers<[1], [1], [0], [0], [0, 0, 1, 0], [], []>} : vector<32x32xbf16>, vector<32x32xbf16>, vector<32x32xf32> -> vector<32x32xf32>
    %cst_20 = arith.constant 0.176776692 : f32
    %51 = vector.broadcast %cst_20 : f32 to vector<32x32xf32>
    %52 = arith.mulf %50, %51 : vector<32x32xf32>
    %53 = tpu.iota {dimensions = array<i32: 0>} : vector<32x32xi32>
    %54 = tpu.iota {dimensions = array<i32: 1>} : vector<32x32xi32>
    %55 = arith.cmpi sle, %54, %53 : vector<32x32xi32>
    %c3_i32 = arith.constant 3 : i32
    %56 = vector.broadcast %c3_i32 : i32 to vector<32x32xi32>
    %57 = arith.shrsi %53, %56 : vector<32x32xi32>
    %c3_i32_21 = arith.constant 3 : i32
    %58 = vector.broadcast %c3_i32_21 : i32 to vector<32x32xi32>
    %59 = arith.shrsi %54, %58 : vector<32x32xi32>
    %60 = arith.cmpi eq, %57, %59 : vector<32x32xi32>
    %61 = arith.andi %55, %60 : vector<32x32xi1>
    %cst_22 = arith.constant -1.000000e+30 : f32
    %62 = vector.broadcast %cst_22 : f32 to vector<32x32xf32>
    %63 = arith.select %61, %52, %62 : vector<32x32xi1>, vector<32x32xf32>
    %cst_23 = arith.constant dense<0xFF800000> : vector<32xf32>
    %64 = vector.multi_reduction <maximumf>, %63, %cst_23 [1] : vector<32x32xf32> to vector<32xf32>
    %65 = vector.shape_cast %64 : vector<32xf32> to vector<32x1xf32>
    %66 = vector.broadcast %65 : vector<32x1xf32> to vector<32x32xf32>
    %67 = arith.subf %63, %66 : vector<32x32xf32>
    %68 = math.exp %67 : vector<32x32xf32>
    %cst_24 = arith.constant dense<0.000000e+00> : vector<32xf32>
    %69 = vector.multi_reduction <add>, %68, %cst_24 [1] : vector<32x32xf32> to vector<32xf32>
    %70 = vector.shape_cast %69 : vector<32xf32> to vector<32x1xf32>
    %71 = tpu.reciprocal %70 {approx = true} : vector<32x1xf32> -> vector<32x1xf32>
    %72 = vector.broadcast %71 : vector<32x1xf32> to vector<32x32xf32>
    %73 = arith.mulf %68, %72 : vector<32x32xf32>
    %74 = arith.truncf %73 : vector<32x32xf32> to vector<32x32xbf16>
    %75 = arith.truncf %47 : vector<32x32xf32> to vector<32x32xbf16>
    %cst_25 = arith.constant dense<0.000000e+00> : vector<32x32xf32>
    %76 = tpu.matmul %74, %75, %cst_25 {dimension_numbers = #tpu.dot_dimension_numbers<[1], [0], [0], [1], [0, 0, 1, 1], [], []>} : vector<32x32xbf16>, vector<32x32xbf16>, vector<32x32xf32> -> vector<32x32xf32>
    %77 = arith.truncf %76 : vector<32x32xf32> to vector<32x32xbf16>
    %c176 = arith.constant 176 : index
    %c0_26 = arith.constant 0 : index
    %78 = vector.load %arg1[%c176, %c0_26] : memref<336x32xbf16, #tpu.memory_space<vmem>>, vector<32x32xbf16>
    %cst_27 = arith.constant dense<0.000000e+00> : vector<32x32xf32>
    %79 = tpu.matmul %77, %78, %cst_27 {dimension_numbers = #tpu.dot_dimension_numbers<[1], [0], [0], [1], [0, 0, 1, 1], [], []>} : vector<32x32xbf16>, vector<32x32xbf16>, vector<32x32xf32> -> vector<32x32xf32>
    %80 = arith.addf %16, %79 : vector<32x32xf32>
    %c2 = arith.constant 2 : index
    %c0_28 = arith.constant 0 : index
    %81 = vector.load %arg2[%c2, %c0_28] : memref<10x64xf32, #tpu.memory_space<vmem>>, vector<1x32xf32>
    %c3 = arith.constant 3 : index
    %c0_29 = arith.constant 0 : index
    %82 = vector.load %arg2[%c3, %c0_29] : memref<10x64xf32, #tpu.memory_space<vmem>>, vector<1x32xf32>
    %cst_30 = arith.constant dense<0.000000e+00> : vector<32xf32>
    %83 = vector.multi_reduction <add>, %80, %cst_30 [1] : vector<32x32xf32> to vector<32xf32>
    %84 = vector.shape_cast %83 : vector<32xf32> to vector<32x1xf32>
    %cst_31 = arith.constant 3.200000e+01 : f32
    %85 = vector.broadcast %cst_31 : f32 to vector<32x1xf32>
    %86 = arith.divf %84, %85 : vector<32x1xf32>
    %87 = arith.mulf %80, %80 : vector<32x32xf32>
    %cst_32 = arith.constant dense<0.000000e+00> : vector<32xf32>
    %88 = vector.multi_reduction <add>, %87, %cst_32 [1] : vector<32x32xf32> to vector<32xf32>
    %89 = vector.shape_cast %88 : vector<32xf32> to vector<32x1xf32>
    %cst_33 = arith.constant 3.200000e+01 : f32
    %90 = vector.broadcast %cst_33 : f32 to vector<32x1xf32>
    %91 = arith.divf %89, %90 : vector<32x1xf32>
    %92 = arith.mulf %86, %86 : vector<32x1xf32>
    %93 = arith.subf %91, %92 : vector<32x1xf32>
    %94 = vector.broadcast %86 : vector<32x1xf32> to vector<32x32xf32>
    %95 = arith.subf %80, %94 : vector<32x32xf32>
    %cst_34 = arith.constant 9.99999974E-6 : f32
    %96 = vector.broadcast %cst_34 : f32 to vector<32x1xf32>
    %97 = arith.addf %93, %96 : vector<32x1xf32>
    %98 = math.rsqrt %97 : vector<32x1xf32>
    %99 = vector.broadcast %98 : vector<32x1xf32> to vector<32x32xf32>
    %100 = arith.mulf %95, %99 : vector<32x32xf32>
    %101 = vector.broadcast %81 : vector<1x32xf32> to vector<32x32xf32>
    %102 = arith.mulf %100, %101 : vector<32x32xf32>
    %103 = vector.broadcast %82 : vector<1x32xf32> to vector<32x32xf32>
    %104 = arith.addf %102, %103 : vector<32x32xf32>
    %105 = arith.truncf %104 : vector<32x32xf32> to vector<32x32xbf16>
    %c208 = arith.constant 208 : index
    %c0_35 = arith.constant 0 : index
    %106 = vector.load %arg1[%c208, %c0_35] : memref<336x32xbf16, #tpu.memory_space<vmem>>, vector<64x32xbf16>
    %cst_36 = arith.constant dense<0.000000e+00> : vector<32x64xf32>
    %107 = tpu.matmul %105, %106, %cst_36 {dimension_numbers = #tpu.dot_dimension_numbers<[1], [1], [0], [0], [0, 0, 1, 0], [], []>} : vector<32x32xbf16>, vector<64x32xbf16>, vector<32x64xf32> -> vector<32x64xf32>
    %c8 = arith.constant 8 : index
    %c0_37 = arith.constant 0 : index
    %108 = vector.load %arg2[%c8, %c0_37] : memref<10x64xf32, #tpu.memory_space<vmem>>, vector<1x64xf32>
    %109 = vector.broadcast %108 : vector<1x64xf32> to vector<32x64xf32>
    %110 = arith.addf %107, %109 : vector<32x64xf32>
    %cst_38 = arith.constant 5.000000e-01 : f32
    %111 = vector.broadcast %cst_38 : f32 to vector<32x64xf32>
    %112 = arith.mulf %111, %110 : vector<32x64xf32>
    %cst_39 = arith.constant 4.471500e-02 : f32
    %113 = vector.broadcast %cst_39 : f32 to vector<32x64xf32>
    %114 = arith.mulf %113, %110 : vector<32x64xf32>
    %115 = arith.mulf %114, %110 : vector<32x64xf32>
    %116 = arith.mulf %115, %110 : vector<32x64xf32>
    %117 = arith.addf %110, %116 : vector<32x64xf32>
    %cst_40 = arith.constant 0.797884583 : f32
    %118 = vector.broadcast %cst_40 : f32 to vector<32x64xf32>
    %119 = arith.mulf %118, %117 : vector<32x64xf32>
    %120 = math.tanh %119 : vector<32x64xf32>
    %cst_41 = arith.constant 1.000000e+00 : f32
    %121 = vector.broadcast %cst_41 : f32 to vector<32x64xf32>
    %122 = arith.addf %121, %120 : vector<32x64xf32>
    %123 = arith.mulf %112, %122 : vector<32x64xf32>
    %124 = arith.truncf %123 : vector<32x64xf32> to vector<32x64xbf16>
    %c272 = arith.constant 272 : index
    %c0_42 = arith.constant 0 : index
    %125 = vector.load %arg1[%c272, %c0_42] : memref<336x32xbf16, #tpu.memory_space<vmem>>, vector<64x32xbf16>
    %cst_43 = arith.constant dense<0.000000e+00> : vector<32x32xf32>
    %126 = tpu.matmul %124, %125, %cst_43 {dimension_numbers = #tpu.dot_dimension_numbers<[1], [0], [0], [1], [0, 0, 1, 1], [], []>} : vector<32x64xbf16>, vector<64x32xbf16>, vector<32x32xf32> -> vector<32x32xf32>
    %127 = arith.addf %80, %126 : vector<32x32xf32>
    %c6 = arith.constant 6 : index
    %c0_44 = arith.constant 0 : index
    %128 = vector.load %arg2[%c6, %c0_44] : memref<10x64xf32, #tpu.memory_space<vmem>>, vector<1x32xf32>
    %129 = vector.broadcast %128 : vector<1x32xf32> to vector<32x32xf32>
    %130 = arith.addf %127, %129 : vector<32x32xf32>
    %131 = tpu.iota {dimensions = array<i32: 0>} : vector<4x32xi32>
    %132 = tpu.iota {dimensions = array<i32: 1>} : vector<4x32xi32>
    %c8_i32 = arith.constant 8 : i32
    %133 = vector.broadcast %c8_i32 : i32 to vector<4x32xi32>
    %134 = arith.muli %131, %133 : vector<4x32xi32>
    %c7_i32_45 = arith.constant 7 : i32
    %135 = vector.broadcast %c7_i32_45 : i32 to vector<4x32xi32>
    %136 = arith.addi %134, %135 : vector<4x32xi32>
    %137 = arith.cmpi eq, %132, %136 : vector<4x32xi32>
    %cst_46 = arith.constant 1.000000e+00 : f32
    %cst_47 = arith.constant 0.000000e+00 : f32
    %138 = vector.broadcast %cst_46 : f32 to vector<4x32xf32>
    %139 = vector.broadcast %cst_47 : f32 to vector<4x32xf32>
    %140 = arith.select %137, %138, %139 : vector<4x32xi1>, vector<4x32xf32>
    %cst_48 = arith.constant dense<0.000000e+00> : vector<4x32xf32>
    %141 = tpu.matmul %140, %130, %cst_48 {dimension_numbers = #tpu.dot_dimension_numbers<[1], [0], [0], [1], [0, 0, 1, 1], [], []>} : vector<4x32xf32>, vector<32x32xf32>, vector<4x32xf32> -> vector<4x32xf32>
    %c4 = arith.constant 4 : index
    %c0_49 = arith.constant 0 : index
    %142 = vector.load %arg2[%c4, %c0_49] : memref<10x64xf32, #tpu.memory_space<vmem>>, vector<1x32xf32>
    %c5 = arith.constant 5 : index
    %c0_50 = arith.constant 0 : index
    %143 = vector.load %arg2[%c5, %c0_50] : memref<10x64xf32, #tpu.memory_space<vmem>>, vector<1x32xf32>
    %cst_51 = arith.constant dense<0.000000e+00> : vector<4xf32>
    %144 = vector.multi_reduction <add>, %141, %cst_51 [1] : vector<4x32xf32> to vector<4xf32>
    %145 = vector.shape_cast %144 : vector<4xf32> to vector<4x1xf32>
    %cst_52 = arith.constant 3.200000e+01 : f32
    %146 = vector.broadcast %cst_52 : f32 to vector<4x1xf32>
    %147 = arith.divf %145, %146 : vector<4x1xf32>
    %148 = arith.mulf %141, %141 : vector<4x32xf32>
    %cst_53 = arith.constant dense<0.000000e+00> : vector<4xf32>
    %149 = vector.multi_reduction <add>, %148, %cst_53 [1] : vector<4x32xf32> to vector<4xf32>
    %150 = vector.shape_cast %149 : vector<4xf32> to vector<4x1xf32>
    %cst_54 = arith.constant 3.200000e+01 : f32
    %151 = vector.broadcast %cst_54 : f32 to vector<4x1xf32>
    %152 = arith.divf %150, %151 : vector<4x1xf32>
    %153 = arith.mulf %147, %147 : vector<4x1xf32>
    %154 = arith.subf %152, %153 : vector<4x1xf32>
    %155 = vector.broadcast %147 : vector<4x1xf32> to vector<4x32xf32>
    %156 = arith.subf %141, %155 : vector<4x32xf32>
    %cst_55 = arith.constant 9.99999974E-6 : f32
    %157 = vector.broadcast %cst_55 : f32 to vector<4x1xf32>
    %158 = arith.addf %154, %157 : vector<4x1xf32>
    %159 = math.rsqrt %158 : vector<4x1xf32>
    %160 = vector.broadcast %159 : vector<4x1xf32> to vector<4x32xf32>
    %161 = arith.mulf %156, %160 : vector<4x32xf32>
    %162 = vector.broadcast %142 : vector<1x32xf32> to vector<4x32xf32>
    %163 = arith.mulf %161, %162 : vector<4x32xf32>
    %164 = vector.broadcast %143 : vector<1x32xf32> to vector<4x32xf32>
    %165 = arith.addf %163, %164 : vector<4x32xf32>
    %c7 = arith.constant 7 : index
    %c0_56 = arith.constant 0 : index
    %166 = vector.load %arg2[%c7, %c0_56] : memref<10x64xf32, #tpu.memory_space<vmem>>, vector<1x32xf32>
    %cst_57 = arith.constant dense<0.000000e+00> : vector<1x4xf32>
    %167 = tpu.matmul %166, %165, %cst_57 {dimension_numbers = #tpu.dot_dimension_numbers<[1], [1], [0], [0], [0, 0, 1, 0], [], []>} : vector<1x32xf32>, vector<4x32xf32>, vector<1x4xf32> -> vector<1x4xf32>
    %c9 = arith.constant 9 : index
    %c0_58 = arith.constant 0 : index
    %168 = vector.load %arg2[%c9, %c0_58] : memref<10x64xf32, #tpu.memory_space<vmem>>, vector<1x1xf32>
    %169 = vector.broadcast %168 : vector<1x1xf32> to vector<1x4xf32>
    %170 = arith.addf %167, %169 : vector<1x4xf32>
    %171 = math.tanh %170 : vector<1x4xf32>
    %c0_59 = arith.constant 0 : index
    %c0_60 = arith.constant 0 : index
    %172 = vector.load %arg3[%c0_59, %c0_60] : memref<1x4xf32, #tpu.memory_space<vmem>>, vector<1x4xf32>
    tpu.vector_store %arg3[%c0_59, %c0_60], %171 {strides = array<i32>} : memref<1x4xf32, #tpu.memory_space<vmem>>, vector<1x4xf32>,
    return
  }
}

</mosaic_0001>

<llo_original>
// kernel: reward_model_forward.1
$region0: #{reward_model_forward.1}
  #allocation0 [shape = 'u32[]', space=smem, size = 0x4, offset = 0x4, fixed_abs, tag = 'smem constant byte address 0x4 - core index']
  #allocation1 [shape = 'u32[144,128]{1,0:T(1,128)}', space=vmem, size = 0x12000, scoped, tag = 'internal scratch']
  %s0 = inlined_call_operand.vmem [shape: s32[32,1], index: 0, kind: input, shape index: {}]
  %s1 = inlined_call_operand.vmem [shape: bf16[336,32], index: 1, kind: input, shape index: {}]
  %s2 = inlined_call_operand.vmem [shape: f32[10,64], index: 2, kind: input, shape index: {}]
  %s3 = inlined_call_operand.vmem [shape: f32[1,4], index: 3, kind: output, shape index: {}]
  %s4 = sld [smem:[#allocation0]]
  $region22: #{reward_model_forward.1} parent=0
    _
  %s6 = ssub.s32 1, %s4
  %s7 = scalar_select 0, %s6, %s4
  // Predicated region
  $region2: #{reward_model_forward.1} parent=0 // pred_check
    _
  $region3: #{reward_model_forward.1} parent=0 // pred_check_branch
    %9 = sbr.rel (0) target = $region5
  $region4: #{reward_model_forward.1} parent=0 // pred_region
    _
  $region5: #{reward_model_forward.1} parent=0 // pred_fallthru
    _
  // Predicated region
  $region6: #{reward_model_forward.1} parent=0 // pred_check
    _
  $region7: #{reward_model_forward.1} parent=0 // pred_check_branch
    %11 = sbr.rel (0) target = $region9
  $region8: #{reward_model_forward.1} parent=0 // pred_region
    _
  $region9: #{reward_model_forward.1} parent=0 // pred_fallthru
    _
  // Predicated region
  $region10: #{reward_model_forward.1} parent=0 // pred_check
    _
  $region11: #{reward_model_forward.1} parent=0 // pred_check_branch
    %13 = sbr.rel (0) target = $region13
  $region12: #{reward_model_forward.1} parent=0 // pred_region
    _
  $region13: #{reward_model_forward.1} parent=0 // pred_fallthru
    _
  %v15 = vld [vmem:[%s0] sm:$0xff]
  %v16 = vld [vmem:[%s0 + $0x8] sm:$0xff]
  %v17 = vld [vmem:[%s0 + $0x10] sm:$0xff]
  %v18 = vld [vmem:[%s0 + $0x18] sm:$0xff]
  %v19 = vlaneseq
  %v20 = vand.u32 %v19, 127
  %v21 = vlaneseq
  %v22 = vshrl.u32 %v21, 7
  %v23 = vadd.s32 %v22, 8
  %v24 = vadd.s32 %v22, 16
  %v25 = vadd.s32 %v22, 24
  %26 = vset.pattern.permute.xlu0 0
  %27 = vperm.xlu0 %26, %v15
  %v28 = vpop.permute.xlu0 %27
  %29 = vset.pattern.permute.xlu0 0
  %30 = vperm.xlu0 %29, %v16
  %v31 = vpop.permute.xlu0 %30
  %32 = vset.pattern.permute.xlu0 0
  %33 = vperm.xlu0 %32, %v17
  %v34 = vpop.permute.xlu0 %33
  %35 = vset.pattern.permute.xlu0 0
  %36 = vperm.xlu0 %35, %v18
  %v37 = vpop.permute.xlu0 %36
  %vm38 = vcmp.eq.s32.totalorder %v20, %v28
  %vm39 = vcmp.eq.s32.totalorder %v20, %v31
  %vm40 = vcmp.eq.s32.totalorder %v20, %v34
  %vm41 = vcmp.eq.s32.totalorder %v20, %v37
  %v42 = vand.u32 %v22, 7
  %v43 = vand.u32 %v23, 7
  %v44 = vand.u32 %v24, 7
  %v45 = vand.u32 %v25, 7
  %v46 = vadd.s32 %v42, 64
  %v47 = vadd.s32 %v43, 64
  %v48 = vadd.s32 %v44, 64
  %v49 = vadd.s32 %v45, 64
  %vm50 = vcmp.eq.s32.totalorder %v20, %v46
  %vm51 = vcmp.eq.s32.totalorder %v20, %v47
  %vm52 = vcmp.eq.s32.totalorder %v20, %v48
  %vm53 = vcmp.eq.s32.totalorder %v20, %v49
  %vm54 = vmor %vm38, %vm50
  %vm55 = vmor %vm39, %vm51
  %vm56 = vmor %vm40, %vm52
  %vm57 = vmor %vm41, %vm53
  %v58 = vsel %vm54, 1.0, 0.0
  %v59 = vsel %vm55, 1.0, 0.0
  %v60 = vsel %vm56, 1.0, 0.0
  %v61 = vsel %vm57, 1.0, 0.0
  %v62 = vpack.c.bf16 %v59, %v58
  %v63 = vpack.c.bf16 %v61, %v60
  %v64 = vld [vmem:[%s1] sm:$0xf]
  %v65 = vld [vmem:[%s1 + $0x4] sm:$0xf]
  %v66 = vld [vmem:[%s1 + $0x8] sm:$0xf]
  %v67 = vld [vmem:[%s1 + $0xc] sm:$0xf]
  %v68 = vld [vmem:[%s1 + $0x10] sm:$0xf]
  %v69 = vld [vmem:[%s1 + $0x14] sm:$0xf]
  %v70 = vld [vmem:[%s1 + $0x18] sm:$0xf]
  %v71 = vld [vmem:[%s1 + $0x1c] sm:$0xf]
  %v72 = vld [vmem:[%s1 + $0x20] sm:$0xf]
  %v73 = vld [vmem:[%s1 + $0x24] sm:$0xf]
  %v84 = vunpack.c.l.b16 %v64
  %v85 = vunpack.c.l.b16 %v65
  %v86 = vunpack.c.l.b16 %v66
  %v87 = vunpack.c.l.b16 %v67
  %v88 = vunpack.c.l.b16 %v68
  %v89 = vunpack.c.l.b16 %v69
  %v90 = vunpack.c.l.b16 %v70
  %v91 = vunpack.c.l.b16 %v71
  %v92 = vunpack.c.l.b16 %v72
  %v93 = vunpack.c.l.b16 %v73
  %v94 = vpack.c.b16 %v85, %v84
  %v95 = vpack.c.b16 %v87, %v86
  %v96 = vpack.c.b16 %v89, %v88
  %v97 = vpack.c.b16 %v91, %v90
  %v98 = vpack.c.b16 %v93, %v92
  %vm104 = vcmask 654336
  %v106 = vsel %vm104, %v62, 0
  %v109 = vsel %vm104, %v63, 0
  %111 = vmatprep.subr.bf16.mxu0 0
  %112 = vmatpush1.bf16.msra.mxu0 %v94
  %113 = vmatprep.subr.bf16.mxu0 0
  %114 = vmatpush1.bf16.msra.mxu0 %v95
  %115 = vmatprep.subr.bf16.mxu0 0
  %116 = vmatpush1.bf16.msra.mxu0 %v96
  %117 = vmatprep.subr.bf16.mxu0 0
  %118 = vmatpush1.bf16.msra.mxu0 %v97
  %119 = vmatprep.subr.bf16.mxu0 0
  %120 = vmatpush1.bf16.msra.mxu0 %v98
  %121 = vmatprep.subr.bf16.mxu0 0
  %122 = vmatpush1.bf16.msra.mxu0 0
  %123 = vmatprep.subr.bf16.mxu0 0
  %124 = vmatpush1.bf16.msra.mxu0 0
  %125 = vmatprep.subr.bf16.mxu0 0
  %126 = vmatpush1.bf16.msra.mxu0 0
  %127 = vmatprep.subr.bf16.mxu0 0
  %128 = vmatpush1.bf16.msra.mxu0 0
  %129 = vmatprep.subr.bf16.mxu0 0
  %130 = vmatpush1.bf16.msra.mxu0 0
  %131 = vmatprep.subr.bf16.mxu0 0
  %132 = vmatpush1.bf16.msra.mxu0 0
  %133 = vmatprep.subr.bf16.mxu0 0
  %134 = vmatpush1.bf16.msra.mxu0 0
  %135 = vmatprep.subr.bf16.mxu0 0
  %136 = vmatpush1.bf16.msra.mxu0 0
  %137 = vmatprep.subr.bf16.mxu0 0
  %138 = vmatpush1.bf16.msra.mxu0 0
  %139 = vmatprep.subr.bf16.mxu0 0
  %140 = vmatpush1.bf16.msra.mxu0 0
  %141 = vmatprep.subr.bf16.mxu0 0
  %142 = vmatpush1.bf16.msra.mxu0 0
  %143 = vmatprep.mubr.bf16.mxu0 0
  %144 = vmatmul.mubr.bf16.gmra.mrb[0].mxu0 %v106
  %v145 = vpop.f32.mrb[0].mxu0
  %v146 = vadd.f32 0.0, %v145
  %v147 = vpop.f32.mrb[0].mxu0
  %v148 = vpop.f32.mrb[0].mxu0
  %v149 = vadd.f32 0.0, %v148
  %v150 = vpop.f32.mrb[0].mxu0
  %151 = vmatprep.mubr.bf16.mxu0 0
  %152 = vmatmul.mubr.bf16.gmra.mrb[0].mxu0 %v109
  %v153 = vpop.f32.mrb[0].mxu0
  %v154 = vadd.f32 0.0, %v153
  %v155 = vpop.f32.mrb[0].mxu0
  %v156 = vpop.f32.mrb[0].mxu0
  %v157 = vadd.f32 0.0, %v156
  %v158 = vpop.f32.mrb[0].mxu0
  %159 = vdwg.mxu0
  %v160 = vld [vmem:[%s2] sm:$0x1]
  %v161 = vld [vmem:[%s2 + $0x1] sm:$0x1]
  %vm162 = vcmask 261120
  %v163 = vsel %vm162, %v146, 0.0
  %164 = vadd.xlane.f32.xlu0 %v163
  %v165 = vpop.xlane.xlu0 %164
  %v166 = vsel %vm162, %v149, 0.0
  %167 = vadd.xlane.f32.xlu0 %v166
  %v168 = vpop.xlane.xlu0 %167
  %v169 = vsel %vm162, %v154, 0.0
  %170 = vadd.xlane.f32.xlu0 %v169
  %v171 = vpop.xlane.xlu0 %170
  %v172 = vsel %vm162, %v157, 0.0
  %173 = vadd.xlane.f32.xlu0 %v172
  %v174 = vpop.xlane.xlu0 %173
  %v175 = vrcp.pop 32.0
  %v176 = vmul.f32 %v165, %v175
  %v177 = vmul.f32 %v168, %v175
  %v178 = vmul.f32 %v171, %v175
  %v179 = vmul.f32 %v174, %v175
  %v180 = vmul.f32 %v146, %v146
  %v181 = vmul.f32 %v149, %v149
  %v182 = vmul.f32 %v154, %v154
  %v183 = vmul.f32 %v157, %v157
  %v184 = vsel %vm162, %v180, 0.0
  %185 = vadd.xlane.f32.xlu0 %v184
  %v186 = vpop.xlane.xlu0 %185
  %v187 = vsel %vm162, %v181, 0.0
  %188 = vadd.xlane.f32.xlu0 %v187
  %v189 = vpop.xlane.xlu0 %188
  %v190 = vsel %vm162, %v182, 0.0
  %191 = vadd.xlane.f32.xlu0 %v190
  %v192 = vpop.xlane.xlu0 %191
  %v193 = vsel %vm162, %v183, 0.0
  %194 = vadd.xlane.f32.xlu0 %v193
  %v195 = vpop.xlane.xlu0 %194
  %v196 = vmul.f32 %v186, %v175
  %v197 = vmul.f32 %v189, %v175
  %v198 = vmul.f32 %v192, %v175
  %v199 = vmul.f32 %v195, %v175
  %v200 = vmul.f32 %v176, %v176
  %v201 = vmul.f32 %v177, %v177
  %v202 = vmul.f32 %v178, %v178
  %v203 = vmul.f32 %v179, %v179
  %v204 = vsub.f32 %v196, %v200
  %v205 = vsub.f32 %v197, %v201
  %v206 = vsub.f32 %v198, %v202
  %v207 = vsub.f32 %v199, %v203
  %v208 = vsub.f32 %v146, %v176
  %v209 = vsub.f32 %v149, %v177
  %v210 = vsub.f32 %v154, %v178
  %v211 = vsub.f32 %v157, %v179
  %v212 = vadd.f32 %v204, 1e-05
  %v213 = vadd.f32 %v205, 1e-05
  %v214 = vadd.f32 %v206, 1e-05
  %v215 = vadd.f32 %v207, 1e-05
  %v216 = vrsqrt.pop %v212
  %v217 = vrsqrt.pop %v213
  %v218 = vrsqrt.pop %v214
  %v219 = vrsqrt.pop %v215
  %v220 = vmul.f32 %v208, %v216
  %v221 = vmul.f32 %v209, %v217
  %v222 = vmul.f32 %v210, %v218
  %v223 = vmul.f32 %v211, %v219
  %v224 = vlaneseq
  %v225 = vshrl.u32 %v224, 7
  %v226 = vsub.s32 0, %v225
  %v227 = vrot.slane %v160, %v226
  %v228 = vmul.f32 %v220, %v227
  %v229 = vmul.f32 %v221, %v227
  %v230 = vmul.f32 %v222, %v227
  %v231 = vmul.f32 %v223, %v227
  %v232 = vlaneseq
  %v233 = vshrl.u32 %v232, 7
  %v234 = vsub.s32 0, %v233
  %v235 = vrot.slane %v161, %v234
  %v236 = vadd.f32 %v228, %v235
  %v237 = vadd.f32 %v229, %v235
  %v238 = vadd.f32 %v230, %v235
  %v239 = vadd.f32 %v231, %v235
  %v240 = vpack.c.bf16 %v237, %v236
  %v241 = vpack.c.bf16 %v239, %v238
  %v242 = vld [vmem:[%s1 + $0x28] sm:$0xf]
  %v243 = vld [vmem:[%s1 + $0x2c] sm:$0xf]
  %v244 = vld [vmem:[%s1 + $0x30] sm:$0xf]
  %v245 = vld [vmem:[%s1 + $0x34] sm:$0xf]
  %v250 = vunpack.c.l.b16 %v242
  %v251 = vunpack.c.l.b16 %v243
  %v252 = vunpack.c.l.b16 %v244
  %v253 = vunpack.c.l.b16 %v245
  %v254 = vpack.c.b16 %v251, %v250
  %v255 = vpack.c.b16 %v253, %v252
  %v259 = vsel %vm162, %v240, 0
  %v262 = vsel %vm162, %v241, 0
  %264 = vmatprep.subr.bf16.mxu0 0
  %265 = vmatpush1.bf16.msra.mxu0 %v254
  %266 = vmatprep.subr.bf16.mxu0 0
  %267 = vmatpush1.bf16.msra.mxu0 %v255
  %268 = vmatprep.subr.bf16.mxu0 0
  %269 = vmatpush1.bf16.msra.mxu0 0
  %270 = vmatprep.subr.bf16.mxu0 0
  %271 = vmatpush1.bf16.msra.mxu0 0
  %272 = vmatprep.subr.bf16.mxu0 0
  %273 = vmatpush1.bf16.msra.mxu0 0
  %274 = vmatprep.subr.bf16.mxu0 0
  %275 = vmatpush1.bf16.msra.mxu0 0
  %276 = vmatprep.subr.bf16.mxu0 0
  %277 = vmatpush1.bf16.msra.mxu0 0
  %278 = vmatprep.subr.bf16.mxu0 0
  %279 = vmatpush1.bf16.msra.mxu0 0
  %280 = vmatprep.subr.bf16.mxu0 0
  %281 = vmatpush1.bf16.msra.mxu0 0
  %282 = vmatprep.subr.bf16.mxu0 0
  %283 = vmatpush1.bf16.msra.mxu0 0
  %284 = vmatprep.subr.bf16.mxu0 0
  %285 = vmatpush1.bf16.msra.mxu0 0
  %286 = vmatprep.subr.bf16.mxu0 0
  %287 = vmatpush1.bf16.msra.mxu0 0
  %288 = vmatprep.subr.bf16.mxu0 0
  %289 = vmatpush1.bf16.msra.mxu0 0
  %290 = vmatprep.subr.bf16.mxu0 0
  %291 = vmatpush1.bf16.msra.mxu0 0
  %292 = vmatprep.subr.bf16.mxu0 0
  %293 = vmatpush1.bf16.msra.mxu0 0
  %294 = vmatprep.subr.bf16.mxu0 0
  %295 = vmatpush1.bf16.msra.mxu0 0
  %296 = vmatprep.mubr.bf16.mxu0 0
  %297 = vmatmul.mubr.bf16.gmra.mrb[0].mxu0 %v259
  %v298 = vpop.f32.mrb[0].mxu0
  %v299 = vadd.f32 0.0, %v298
  %v300 = vpop.f32.mrb[0].mxu0
  %v301 = vpop.f32.mrb[0].mxu0
  %v302 = vadd.f32 0.0, %v301
  %v303 = vpop.f32.mrb[0].mxu0
  %304 = vmatprep.mubr.bf16.mxu0 0
  %305 = vmatmul.mubr.bf16.gmra.mrb[0].mxu0 %v262
  %v306 = vpop.f32.mrb[0].mxu0
  %v307 = vadd.f32 0.0, %v306
  %v308 = vpop.f32.mrb[0].mxu0
  %v309 = vpop.f32.mrb[0].mxu0
  %v310 = vadd.f32 0.0, %v309
  %v311 = vpop.f32.mrb[0].mxu0
  %312 = vdwg.mxu0
  %v313 = vld [vmem:[%s1 + $0x38] sm:$0xf]
  %v314 = vld [vmem:[%s1 + $0x3c] sm:$0xf]
  %v315 = vld [vmem:[%s1 + $0x40] sm:$0xf]
  %v316 = vld [vmem:[%s1 + $0x44] sm:$0xf]
  %v321 = vunpack.c.l.b16 %v313
  %v322 = vunpack.c.l.b16 %v314
  %v323 = vunpack.c.l.b16 %v315
  %v324 = vunpack.c.l.b16 %v316
  %v325 = vpack.c.b16 %v322, %v321
  %v326 = vpack.c.b16 %v324, %v323
  %329 = vmatprep.subr.bf16.mxu0 0
  %330 = vmatpush1.bf16.msra.mxu0 %v325
  %331 = vmatprep.subr.bf16.mxu0 0
  %332 = vmatpush1.bf16.msra.mxu0 %v326
  %333 = vmatprep.subr.bf16.mxu0 0
  %334 = vmatpush1.bf16.msra.mxu0 0
  %335 = vmatprep.subr.bf16.mxu0 0
  %336 = vmatpush1.bf16.msra.mxu0 0
  %337 = vmatprep.subr.bf16.mxu0 0
  %338 = vmatpush1.bf16.msra.mxu0 0
  %339 = vmatprep.subr.bf16.mxu0 0
  %340 = vmatpush1.bf16.msra.mxu0 0
  %341 = vmatprep.subr.bf16.mxu0 0
  %342 = vmatpush1.bf16.msra.mxu0 0
  %343 = vmatprep.subr.bf16.mxu0 0
  %344 = vmatpush1.bf16.msra.mxu0 0
  %345 = vmatprep.subr.bf16.mxu0 0
  %346 = vmatpush1.bf16.msra.mxu0 0
  %347 = vmatprep.subr.bf16.mxu0 0
  %348 = vmatpush1.bf16.msra.mxu0 0
  %349 = vmatprep.subr.bf16.mxu0 0
  %350 = vmatpush1.bf16.msra.mxu0 0
  %351 = vmatprep.subr.bf16.mxu0 0
  %352 = vmatpush1.bf16.msra.mxu0 0
  %353 = vmatprep.subr.bf16.mxu0 0
  %354 = vmatpush1.bf16.msra.mxu0 0
  %355 = vmatprep.subr.bf16.mxu0 0
  %356 = vmatpush1.bf16.msra.mxu0 0
  %357 = vmatprep.subr.bf16.mxu0 0
  %358 = vmatpush1.bf16.msra.mxu0 0
  %359 = vmatprep.subr.bf16.mxu0 0
  %360 = vmatpush1.bf16.msra.mxu0 0
  %361 = vmatprep.mubr.bf16.mxu0 0
  %362 = vmatmul.mubr.bf16.gmra.mrb[0].mxu0 %v259
  %v363 = vpop.f32.mrb[0].mxu0
  %v364 = vadd.f32 0.0, %v363
  %v365 = vpop.f32.mrb[0].mxu0
  %v366 = vpop.f32.mrb[0].mxu0
  %v367 = vadd.f32 0.0, %v366
  %v368 = vpop.f32.mrb[0].mxu0
  %369 = vmatprep.mubr.bf16.mxu0 0
  %370 = vmatmul.mubr.bf16.gmra.mrb[0].mxu0 %v262
  %v371 = vpop.f32.mrb[0].mxu0
  %v372 = vadd.f32 0.0, %v371
  %v373 = vpop.f32.mrb[0].mxu0
  %v374 = vpop.f32.mrb[0].mxu0
  %v375 = vadd.f32 0.0, %v374
  %v376 = vpop.f32.mrb[0].mxu0
  %377 = vdwg.mxu0
  %v378 = vld [vmem:[%s1 + $0x48] sm:$0xf]
  %v379 = vld [vmem:[%s1 + $0x4c] sm:$0xf]
  %v380 = vld [vmem:[%s1 + $0x50] sm:$0xf]
  %v381 = vld [vmem:[%s1 + $0x54] sm:$0xf]
  %v386 = vunpack.c.l.b16 %v378
  %v387 = vunpack.c.l.b16 %v379
  %v388 = vunpack.c.l.b16 %v380
  %v389 = vunpack.c.l.b16 %v381
  %v390 = vpack.c.b16 %v387, %v386
  %v391 = vpack.c.b16 %v389, %v388
  %394 = vmatprep.subr.bf16.mxu0 0
  %395 = vmatpush1.bf16.msra.mxu0 %v390
  %396 = vmatprep.subr.bf16.mxu0 0
  %397 = vmatpush1.bf16.msra.mxu0 %v391
  %398 = vmatprep.subr.bf16.mxu0 0
  %399 = vmatpush1.bf16.msra.mxu0 0
  %400 = vmatprep.subr.bf16.mxu0 0
  %401 = vmatpush1.bf16.msra.mxu0 0
  %402 = vmatprep.subr.bf16.mxu0 0
  %403 = vmatpush1.bf16.msra.mxu0 0
  %404 = vmatprep.subr.bf16.mxu0 0
  %405 = vmatpush1.bf16.msra.mxu0 0
  %406 = vmatprep.subr.bf16.mxu0 0
  %407 = vmatpush1.bf16.msra.mxu0 0
  %408 = vmatprep.subr.bf16.mxu0 0
  %409 = vmatpush1.bf16.msra.mxu0 0
  %410 = vmatprep.subr.bf16.mxu0 0
  %411 = vmatpush1.bf16.msra.mxu0 0
  %412 = vmatprep.subr.bf16.mxu0 0
  %413 = vmatpush1.bf16.msra.mxu0 0
  %414 = vmatprep.subr.bf16.mxu0 0
  %415 = vmatpush1.bf16.msra.mxu0 0
  %416 = vmatprep.subr.bf16.mxu0 0
  %417 = vmatpush1.bf16.msra.mxu0 0
  %418 = vmatprep.subr.bf16.mxu0 0
  %419 = vmatpush1.bf16.msra.mxu0 0
  %420 = vmatprep.subr.bf16.mxu0 0
  %421 = vmatpush1.bf16.msra.mxu0 0
  %422 = vmatprep.subr.bf16.mxu0 0
  %423 = vmatpush1.bf16.msra.mxu0 0
  %424 = vmatprep.subr.bf16.mxu0 0
  %425 = vmatpush1.bf16.msra.mxu0 0
  %426 = vmatprep.mubr.bf16.mxu0 0
  %427 = vmatmul.mubr.bf16.gmra.mrb[0].mxu0 %v259
  %v428 = vpop.f32.mrb[0].mxu0
  %v429 = vadd.f32 0.0, %v428
  %v430 = vpop.f32.mrb[0].mxu0
  %v431 = vpop.f32.mrb[0].mxu0
  %v432 = vadd.f32 0.0, %v431
  %v433 = vpop.f32.mrb[0].mxu0
  %434 = vmatprep.mubr.bf16.mxu0 0
  %435 = vmatmul.mubr.bf16.gmra.mrb[0].mxu0 %v262
  %v436 = vpop.f32.mrb[0].mxu0
  %v437 = vadd.f32 0.0, %v436
  %v438 = vpop.f32.mrb[0].mxu0
  %v439 = vpop.f32.mrb[0].mxu0
  %v440 = vadd.f32 0.0, %v439
  %v441 = vpop.f32.mrb[0].mxu0
  %442 = vdwg.mxu0
  %v443 = vpack.c.bf16 %v302, %v299
  %v444 = vpack.c.bf16 %v310, %v307
  %v445 = vpack.c.bf16 %v367, %v364
  %v446 = vpack.c.bf16 %v375, %v372
  %v448 = vsel %vm162, %v443, 0
  %v451 = vsel %vm162, %v444, 0
  %v454 = vsel %vm162, %v445, 0
  %v457 = vsel %vm162, %v446, 0
  %459 = vmatprep.subr.bf16.mxu0 0
  %460 = vmatpush1.bf16.xpose.msra.mxu0 %v454
  %461 = vmatprep.subr.bf16.mxu0 0
  %462 = vmatpush1.bf16.xpose.msra.mxu0 %v457
  %463 = vmatprep.subr.bf16.mxu0 0
  %464 = vmatpush1.bf16.xpose.msra.mxu0 0
  %465 = vmatprep.subr.bf16.mxu0 0
  %466 = vmatpush1.bf16.xpose.msra.mxu0 0
  %467 = vmatprep.subr.bf16.mxu0 0
  %468 = vmatpush1.bf16.xpose.msra.mxu0 0
  %469 = vmatprep.subr.bf16.mxu0 0
  %470 = vmatpush1.bf16.xpose.msra.mxu0 0
  %471 = vmatprep.subr.bf16.mxu0 0
  %472 = vmatpush1.bf16.xpose.msra.mxu0 0
  %473 = vmatprep.subr.bf16.mxu0 0
  %474 = vmatpush1.bf16.xpose.msra.mxu0 0
  %475 = vmatprep.subr.bf16.mxu0 0
  %476 = vmatpush1.bf16.xpose.msra.mxu0 0
  %477 = vmatprep.subr.bf16.mxu0 0
  %478 = vmatpush1.bf16.xpose.msra.mxu0 0
  %479 = vmatprep.subr.bf16.mxu0 0
  %480 = vmatpush1.bf16.xpose.msra.mxu0 0
  %481 = vmatprep.subr.bf16.mxu0 0
  %482 = vmatpush1.bf16.xpose.msra.mxu0 0
  %483 = vmatprep.subr.bf16.mxu0 0
  %484 = vmatpush1.bf16.xpose.msra.mxu0 0
  %485 = vmatprep.subr.bf16.mxu0 0
  %486 = vmatpush1.bf16.xpose.msra.mxu0 0
  %487 = vmatprep.subr.bf16.mxu0 0
  %488 = vmatpush1.bf16.xpose.msra.mxu0 0
  %489 = vmatprep.subr.bf16.mxu0 0
  %490 = vmatpush1.bf16.xpose.msra.mxu0 0
  %491 = vmatprep.mubr.bf16.mxu0 0
  %492 = vmatmul.mubr.bf16.gmra.mrb[0].mxu0 %v448
  %v493 = vpop.f32.mrb[0].mxu0
  %v494 = vadd.f32 0.0, %v493
  %v495 = vpop.f32.mrb[0].mxu0
  %v496 = vpop.f32.mrb[0].mxu0
  %v497 = vadd.f32 0.0, %v496
  %v498 = vpop.f32.mrb[0].mxu0
  %499 = vmatprep.mubr.bf16.mxu0 0
  %500 = vmatmul.mubr.bf16.gmra.mrb[0].mxu0 %v451
  %v501 = vpop.f32.mrb[0].mxu0
  %v502 = vadd.f32 0.0, %v501
  %v503 = vpop.f32.mrb[0].mxu0
  %v504 = vpop.f32.mrb[0].mxu0
  %v505 = vadd.f32 0.0, %v504
  %v506 = vpop.f32.mrb[0].mxu0
  %507 = vdwg.mxu0
  %v508 = vmul.f32 %v494, 0.17677669
  %v509 = vmul.f32 %v497, 0.17677669
  %v510 = vmul.f32 %v502, 0.17677669
  %v511 = vmul.f32 %v505, 0.17677669
  %vm512 = vcmp.le.s32.totalorder %v20, %v22
  %vm513 = vcmp.le.s32.totalorder %v20, %v23
  %vm514 = vcmp.le.s32.totalorder %v20, %v24
  %vm515 = vcmp.le.s32.totalorder %v20, %v25
  %v516 = vshra.s32 %v22, 3
  %v517 = vshra.s32 %v23, 3
  %v518 = vshra.s32 %v24, 3
  %v519 = vshra.s32 %v25, 3
  %v520 = vshra.s32 %v20, 3
  %vm521 = vcmp.eq.s32.totalorder %v516, %v520
  %vm522 = vcmp.eq.s32.totalorder %v517, %v520
  %vm523 = vcmp.eq.s32.totalorder %v518, %v520
  %vm524 = vcmp.eq.s32.totalorder %v519, %v520
  %vm525 = vmand %vm512, %vm521
  %vm526 = vmand %vm513, %vm522
  %vm527 = vmand %vm514, %vm523
  %vm528 = vmand %vm515, %vm524
  %v529 = vsel %vm525, %v508, -1e+30
  %v530 = vsel %vm526, %v509, -1e+30
  %v531 = vsel %vm527, %v510, -1e+30
  %v532 = vsel %vm528, %v511, -1e+30
  %v533 = vsel %vm162, %v529, -inf
  %534 = vmax.xlane.f32.xlu0 %v533
  %v535 = vpop.xlane.xlu0 %534
  %v536 = vsel %vm162, %v530, -inf
  %537 = vmax.xlane.f32.xlu0 %v536
  %v538 = vpop.xlane.xlu0 %537
  %v539 = vsel %vm162, %v531, -inf
  %540 = vmax.xlane.f32.xlu0 %v539
  %v541 = vpop.xlane.xlu0 %540
  %v542 = vsel %vm162, %v532, -inf
  %543 = vmax.xlane.f32.xlu0 %v542
  %v544 = vpop.xlane.xlu0 %543
  %v545 = vsub.f32 %v529, %v535
  %v546 = vsub.f32 %v530, %v538
  %v547 = vsub.f32 %v531, %v541
  %v548 = vsub.f32 %v532, %v544
  %v549 = vmul.f32 %v545, 1.442695
  %v550 = vpow.pop %v549
  %v551 = vmul.f32 %v546, 1.442695
  %v552 = vpow.pop %v551
  %v553 = vmul.f32 %v547, 1.442695
  %v554 = vpow.pop %v553
  %v555 = vmul.f32 %v548, 1.442695
  %v556 = vpow.pop %v555
  %v557 = vsel %vm162, %v550, 0.0
  %558 = vadd.xlane.f32.xlu0 %v557
  %v559 = vpop.xlane.xlu0 %558
  %v560 = vsel %vm162, %v552, 0.0
  %561 = vadd.xlane.f32.xlu0 %v560
  %v562 = vpop.xlane.xlu0 %561
  %v563 = vsel %vm162, %v554, 0.0
  %564 = vadd.xlane.f32.xlu0 %v563
  %v565 = vpop.xlane.xlu0 %564
  %v566 = vsel %vm162, %v556, 0.0
  %567 = vadd.xlane.f32.xlu0 %v566
  %v568 = vpop.xlane.xlu0 %567
  %v569 = vrcp.pop %v559
  %v570 = vrcp.pop %v562
  %v571 = vrcp.pop %v565
  %v572 = vrcp.pop %v568
  %v573 = vmul.f32 %v550, %v569
  %v574 = vmul.f32 %v552, %v570
  %v575 = vmul.f32 %v554, %v571
  %v576 = vmul.f32 %v556, %v572
  %v577 = vpack.c.bf16 %v574, %v573
  %v578 = vpack.c.bf16 %v576, %v575
  %v579 = vpack.c.bf16 %v432, %v429
  %v580 = vpack.c.bf16 %v440, %v437
  %v582 = vsel %vm162, %v577, 0
  %v585 = vsel %vm162, %v578, 0
  %587 = vmatprep.subr.bf16.mxu0 0
  %588 = vmatpush1.bf16.msra.mxu0 %v579
  %589 = vmatprep.subr.bf16.mxu0 0
  %590 = vmatpush1.bf16.msra.mxu0 %v580
  %591 = vmatprep.subr.bf16.mxu0 0
  %592 = vmatpush1.bf16.msra.mxu0 0
  %593 = vmatprep.subr.bf16.mxu0 0
  %594 = vmatpush1.bf16.msra.mxu0 0
  %595 = vmatprep.subr.bf16.mxu0 0
  %596 = vmatpush1.bf16.msra.mxu0 0
  %597 = vmatprep.subr.bf16.mxu0 0
  %598 = vmatpush1.bf16.msra.mxu0 0
  %599 = vmatprep.subr.bf16.mxu0 0
  %600 = vmatpush1.bf16.msra.mxu0 0
  %601 = vmatprep.subr.bf16.mxu0 0
  %602 = vmatpush1.bf16.msra.mxu0 0
  %603 = vmatprep.subr.bf16.mxu0 0
  %604 = vmatpush1.bf16.msra.mxu0 0
  %605 = vmatprep.subr.bf16.mxu0 0
  %606 = vmatpush1.bf16.msra.mxu0 0
  %607 = vmatprep.subr.bf16.mxu0 0
  %608 = vmatpush1.bf16.msra.mxu0 0
  %609 = vmatprep.subr.bf16.mxu0 0
  %610 = vmatpush1.bf16.msra.mxu0 0
  %611 = vmatprep.subr.bf16.mxu0 0
  %612 = vmatpush1.bf16.msra.mxu0 0
  %613 = vmatprep.subr.bf16.mxu0 0
  %614 = vmatpush1.bf16.msra.mxu0 0
  %615 = vmatprep.subr.bf16.mxu0 0
  %616 = vmatpush1.bf16.msra.mxu0 0
  %617 = vmatprep.subr.bf16.mxu0 0
  %618 = vmatpush1.bf16.msra.mxu0 0
  %619 = vmatprep.mubr.bf16.mxu0 0
  %620 = vmatmul.mubr.bf16.gmra.mrb[0].mxu0 %v582
  %v621 = vpop.f32.mrb[0].mxu0
  %v622 = vadd.f32 0.0, %v621
  %v623 = vpop.f32.mrb[0].mxu0
  %v624 = vpop.f32.mrb[0].mxu0
  %v625 = vadd.f32 0.0, %v624
  %v626 = vpop.f32.mrb[0].mxu0
  %627 = vmatprep.mubr.bf16.mxu0 0
  %628 = vmatmul.mubr.bf16.gmra.mrb[0].mxu0 %v585
  %v629 = vpop.f32.mrb[0].mxu0
  %v630 = vadd.f32 0.0, %v629
  %v631 = vpop.f32.mrb[0].mxu0
  %v632 = vpop.f32.mrb[0].mxu0
  %v633 = vadd.f32 0.0, %v632
  %v634 = vpop.f32.mrb[0].mxu0
  %635 = vdwg.mxu0
  %v636 = vpack.c.bf16 %v625, %v622
  %v637 = vpack.c.bf16 %v633, %v630
  %v638 = vld [vmem:[%s1 + $0x58] sm:$0xf]
  %v639 = vld [vmem:[%s1 + $0x5c] sm:$0xf]
  %v640 = vld [vmem:[%s1 + $0x60] sm:$0xf]
  %v641 = vld [vmem:[%s1 + $0x64] sm:$0xf]
  %v646 = vunpack.c.l.b16 %v638
  %v647 = vunpack.c.l.b16 %v639
  %v648 = vunpack.c.l.b16 %v640
  %v649 = vunpack.c.l.b16 %v641
  %v650 = vpack.c.b16 %v647, %v646
  %v651 = vpack.c.b16 %v649, %v648
  %v655 = vsel %vm162, %v636, 0
  %v658 = vsel %vm162, %v637, 0
  %660 = vmatprep.subr.bf16.mxu0 0
  %661 = vmatpush1.bf16.msra.mxu0 %v650
  %662 = vmatprep.subr.bf16.mxu0 0
  %663 = vmatpush1.bf16.msra.mxu0 %v651
  %664 = vmatprep.subr.bf16.mxu0 0
  %665 = vmatpush1.bf16.msra.mxu0 0
  %666 = vmatprep.subr.bf16.mxu0 0
  %667 = vmatpush1.bf16.msra.mxu0 0
  %668 = vmatprep.subr.bf16.mxu0 0
  %669 = vmatpush1.bf16.msra.mxu0 0
  %670 = vmatprep.subr.bf16.mxu0 0
  %671 = vmatpush1.bf16.msra.mxu0 0
  %672 = vmatprep.subr.bf16.mxu0 0
  %673 = vmatpush1.bf16.msra.mxu0 0
  %674 = vmatprep.subr.bf16.mxu0 0
  %675 = vmatpush1.bf16.msra.mxu0 0
  %676 = vmatprep.subr.bf16.mxu0 0
  %677 = vmatpush1.bf16.msra.mxu0 0
  %678 = vmatprep.subr.bf16.mxu0 0
  %679 = vmatpush1.bf16.msra.mxu0 0
  %680 = vmatprep.subr.bf16.mxu0 0
  %681 = vmatpush1.bf16.msra.mxu0 0
  %682 = vmatprep.subr.bf16.mxu0 0
  %683 = vmatpush1.bf16.msra.mxu0 0
  %684 = vmatprep.subr.bf16.mxu0 0
  %685 = vmatpush1.bf16.msra.mxu0 0
  %686 = vmatprep.subr.bf16.mxu0 0
  %687 = vmatpush1.bf16.msra.mxu0 0
  %688 = vmatprep.subr.bf16.mxu0 0
  %689 = vmatpush1.bf16.msra.mxu0 0
  %690 = vmatprep.subr.bf16.mxu0 0
  %691 = vmatpush1.bf16.msra.mxu0 0
  %692 = vmatprep.mubr.bf16.mxu0 0
  %693 = vmatmul.mubr.bf16.gmra.mrb[0].mxu0 %v655
  %v694 = vpop.f32.mrb[0].mxu0
  %v695 = vadd.f32 0.0, %v694
  %v696 = vpop.f32.mrb[0].mxu0
  %v697 = vpop.f32.mrb[0].mxu0
  %v698 = vadd.f32 0.0, %v697
  %v699 = vpop.f32.mrb[0].mxu0
  %700 = vmatprep.mubr.bf16.mxu0 0
  %701 = vmatmul.mubr.bf16.gmra.mrb[0].mxu0 %v658
  %v702 = vpop.f32.mrb[0].mxu0
  %v703 = vadd.f32 0.0, %v702
  %v704 = vpop.f32.mrb[0].mxu0
  %v705 = vpop.f32.mrb[0].mxu0
  %v706 = vadd.f32 0.0, %v705
  %v707 = vpop.f32.mrb[0].mxu0
  %708 = vdwg.mxu0
  %v709 = vadd.f32 %v146, %v695
  %v710 = vadd.f32 %v149, %v698
  %v711 = vadd.f32 %v154, %v703
  %v712 = vadd.f32 %v157, %v706
  %v713 = vld [vmem:[%s2 + $0x2] sm:$0x1]
  %v714 = vld [vmem:[%s2 + $0x3] sm:$0x1]
  %v715 = vsel %vm162, %v709, 0.0
  %716 = vadd.xlane.f32.xlu0 %v715
  %v717 = vpop.xlane.xlu0 %716
  %v718 = vsel %vm162, %v710, 0.0
  %719 = vadd.xlane.f32.xlu0 %v718
  %v720 = vpop.xlane.xlu0 %719
  %v721 = vsel %vm162, %v711, 0.0
  %722 = vadd.xlane.f32.xlu0 %v721
  %v723 = vpop.xlane.xlu0 %722
  %v724 = vsel %vm162, %v712, 0.0
  %725 = vadd.xlane.f32.xlu0 %v724
  %v726 = vpop.xlane.xlu0 %725
  %v727 = vmul.f32 %v717, %v175
  %v728 = vmul.f32 %v720, %v175
  %v729 = vmul.f32 %v723, %v175
  %v730 = vmul.f32 %v726, %v175
  %v731 = vmul.f32 %v709, %v709
  %v732 = vmul.f32 %v710, %v710
  %v733 = vmul.f32 %v711, %v711
  %v734 = vmul.f32 %v712, %v712
  %v735 = vsel %vm162, %v731, 0.0
  %736 = vadd.xlane.f32.xlu0 %v735
  %v737 = vpop.xlane.xlu0 %736
  %v738 = vsel %vm162, %v732, 0.0
  %739 = vadd.xlane.f32.xlu0 %v738
  %v740 = vpop.xlane.xlu0 %739
  %v741 = vsel %vm162, %v733, 0.0
  %742 = vadd.xlane.f32.xlu0 %v741
  %v743 = vpop.xlane.xlu0 %742
  %v744 = vsel %vm162, %v734, 0.0
  %745 = vadd.xlane.f32.xlu0 %v744
  %v746 = vpop.xlane.xlu0 %745
  %v747 = vmul.f32 %v737, %v175
  %v748 = vmul.f32 %v740, %v175
  %v749 = vmul.f32 %v743, %v175
  %v750 = vmul.f32 %v746, %v175
  %v751 = vmul.f32 %v727, %v727
  %v752 = vmul.f32 %v728, %v728
  %v753 = vmul.f32 %v729, %v729
  %v754 = vmul.f32 %v730, %v730
  %v755 = vsub.f32 %v747, %v751
  %v756 = vsub.f32 %v748, %v752
  %v757 = vsub.f32 %v749, %v753
  %v758 = vsub.f32 %v750, %v754
  %v759 = vsub.f32 %v709, %v727
  %v760 = vsub.f32 %v710, %v728
  %v761 = vsub.f32 %v711, %v729
  %v762 = vsub.f32 %v712, %v730
  %v763 = vadd.f32 %v755, 1e-05
  %v764 = vadd.f32 %v756, 1e-05
  %v765 = vadd.f32 %v757, 1e-05
  %v766 = vadd.f32 %v758, 1e-05
  %v767 = vrsqrt.pop %v763
  %v768 = vrsqrt.pop %v764
  %v769 = vrsqrt.pop %v765
  %v770 = vrsqrt.pop %v766
  %v771 = vmul.f32 %v759, %v767
  %v772 = vmul.f32 %v760, %v768
  %v773 = vmul.f32 %v761, %v769
  %v774 = vmul.f32 %v762, %v770
  %v775 = vlaneseq
  %v776 = vshrl.u32 %v775, 7
  %v777 = vsub.s32 0, %v776
  %v778 = vrot.slane %v713, %v777
  %v779 = vmul.f32 %v771, %v778
  %v780 = vmul.f32 %v772, %v778
  %v781 = vmul.f32 %v773, %v778
  %v782 = vmul.f32 %v774, %v778
  %v783 = vlaneseq
  %v784 = vshrl.u32 %v783, 7
  %v785 = vsub.s32 0, %v784
  %v786 = vrot.slane %v714, %v785
  %v787 = vadd.f32 %v779, %v786
  %v788 = vadd.f32 %v780, %v786
  %v789 = vadd.f32 %v781, %v786
  %v790 = vadd.f32 %v782, %v786
  %v791 = vpack.c.bf16 %v788, %v787
  %v792 = vpack.c.bf16 %v790, %v789
  %v793 = vld [vmem:[%s1 + $0x68] sm:$0xf]
  %v794 = vld [vmem:[%s1 + $0x6c] sm:$0xf]
  %v795 = vld [vmem:[%s1 + $0x70] sm:$0xf]
  %v796 = vld [vmem:[%s1 + $0x74] sm:$0xf]
  %v797 = vld [vmem:[%s1 + $0x78] sm:$0xf]
  %v798 = vld [vmem:[%s1 + $0x7c] sm:$0xf]
  %v799 = vld [vmem:[%s1 + $0x80] sm:$0xf]
  %v800 = vld [vmem:[%s1 + $0x84] sm:$0xf]
  %v801 = vld [vmem:[%s2 + $0x8] sm:$0x1]
  %v802 = vlaneseq
  %v803 = vshrl.u32 %v802, 7
  %v804 = vsub.s32 0, %v803
  %v805 = vrot.slane %v801, %v804
  %v814 = vunpack.c.l.b16 %v793
  %v815 = vunpack.c.l.b16 %v794
  %v816 = vunpack.c.l.b16 %v795
  %v817 = vunpack.c.l.b16 %v796
  %v818 = vunpack.c.l.b16 %v797
  %v819 = vunpack.c.l.b16 %v798
  %v820 = vunpack.c.l.b16 %v799
  %v821 = vunpack.c.l.b16 %v800
  %v822 = vpack.c.b16 %v815, %v814
  %v823 = vpack.c.b16 %v817, %v816
  %v824 = vpack.c.b16 %v819, %v818
  %v825 = vpack.c.b16 %v821, %v820
  %v827 = vsel %vm162, %v791, 0
  %v830 = vsel %vm162, %v792, 0
  %v833 = vsel %vm162, %v822, 0
  %v836 = vsel %vm162, %v823, 0
  %v839 = vsel %vm162, %v824, 0
  %v842 = vsel %vm162, %v825, 0
  %844 = vmatprep.subr.bf16.mxu0 0
  %845 = vmatpush1.bf16.xpose.msra.mxu0 %v833
  %846 = vmatprep.subr.bf16.mxu0 0
  %847 = vmatpush1.bf16.xpose.msra.mxu0 %v836
  %848 = vmatprep.subr.bf16.mxu0 0
  %849 = vmatpush1.bf16.xpose.msra.mxu0 %v839
  %850 = vmatprep.subr.bf16.mxu0 0
  %851 = vmatpush1.bf16.xpose.msra.mxu0 %v842
  %852 = vmatprep.subr.bf16.mxu0 0
  %853 = vmatpush1.bf16.xpose.msra.mxu0 0
  %854 = vmatprep.subr.bf16.mxu0 0
  %855 = vmatpush1.bf16.xpose.msra.mxu0 0
  %856 = vmatprep.subr.bf16.mxu0 0
  %857 = vmatpush1.bf16.xpose.msra.mxu0 0
  %858 = vmatprep.subr.bf16.mxu0 0
  %859 = vmatpush1.bf16.xpose.msra.mxu0 0
  %860 = vmatprep.subr.bf16.mxu0 0
  %861 = vmatpush1.bf16.xpose.msra.mxu0 0
  %862 = vmatprep.subr.bf16.mxu0 0
  %863 = vmatpush1.bf16.xpose.msra.mxu0 0
  %864 = vmatprep.subr.bf16.mxu0 0
  %865 = vmatpush1.bf16.xpose.msra.mxu0 0
  %866 = vmatprep.subr.bf16.mxu0 0
  %867 = vmatpush1.bf16.xpose.msra.mxu0 0
  %868 = vmatprep.subr.bf16.mxu0 0
  %869 = vmatpush1.bf16.xpose.msra.mxu0 0
  %870 = vmatprep.subr.bf16.mxu0 0
  %871 = vmatpush1.bf16.xpose.msra.mxu0 0
  %872 = vmatprep.subr.bf16.mxu0 0
  %873 = vmatpush1.bf16.xpose.msra.mxu0 0
  %874 = vmatprep.subr.bf16.mxu0 0
  %875 = vmatpush1.bf16.xpose.msra.mxu0 0
  %876 = vmatprep.mubr.bf16.mxu0 0
  %877 = vmatmul.mubr.bf16.gmra.mrb[0].mxu0 %v827
  %v878 = vpop.f32.mrb[0].mxu0
  %v879 = vadd.f32 %v805, %v878
  %v880 = vpop.f32.mrb[0].mxu0
  %v881 = vpop.f32.mrb[0].mxu0
  %v882 = vadd.f32 %v805, %v881
  %v883 = vpop.f32.mrb[0].mxu0
  %884 = vmatprep.mubr.bf16.mxu0 0
  %885 = vmatmul.mubr.bf16.gmra.mrb[0].mxu0 %v830
  %v886 = vpop.f32.mrb[0].mxu0
  %v887 = vadd.f32 %v805, %v886
  %v888 = vpop.f32.mrb[0].mxu0
  %v889 = vpop.f32.mrb[0].mxu0
  %v890 = vadd.f32 %v805, %v889
  %v891 = vpop.f32.mrb[0].mxu0
  %892 = vdwg.mxu0
  %v893 = vmul.f32 %v879, 0.5
  %v894 = vmul.f32 %v882, 0.5
  %v895 = vmul.f32 %v887, 0.5
  %v896 = vmul.f32 %v890, 0.5
  %v897 = vmul.f32 %v879, 0.044715
  %v898 = vmul.f32 %v882, 0.044715
  %v899 = vmul.f32 %v887, 0.044715
  %v900 = vmul.f32 %v890, 0.044715
  %v901 = vmul.f32 %v897, %v879
  %v902 = vmul.f32 %v898, %v882
  %v903 = vmul.f32 %v899, %v887
  %v904 = vmul.f32 %v900, %v890
  %v905 = vmul.f32 %v901, %v879
  %v906 = vmul.f32 %v902, %v882
  %v907 = vmul.f32 %v903, %v887
  %v908 = vmul.f32 %v904, %v890
  %v909 = vadd.f32 %v879, %v905
  %v910 = vadd.f32 %v882, %v906
  %v911 = vadd.f32 %v887, %v907
  %v912 = vadd.f32 %v890, %v908
  %v913 = vmul.f32 %v909, 0.7978846
  %v914 = vmul.f32 %v910, 0.7978846
  %v915 = vmul.f32 %v911, 0.7978846
  %v916 = vmul.f32 %v912, 0.7978846
  %v917 = vtanh.pop %v913
  %v918 = vtanh.pop %v914
  %v919 = vtanh.pop %v915
  %v920 = vtanh.pop %v916
  %v921 = vadd.f32 %v917, 1.0
  %v922 = vadd.f32 %v918, 1.0
  %v923 = vadd.f32 %v919, 1.0
  %v924 = vadd.f32 %v920, 1.0
  %v925 = vmul.f32 %v893, %v921
  %v926 = vmul.f32 %v894, %v922
  %v927 = vmul.f32 %v895, %v923
  %v928 = vmul.f32 %v896, %v924
  %v929 = vpack.c.bf16 %v926, %v925
  %v930 = vpack.c.bf16 %v928, %v927
  %v931 = vld [vmem:[%s1 + $0x88] sm:$0xf]
  %v932 = vld [vmem:[%s1 + $0x8c] sm:$0xf]
  %v933 = vld [vmem:[%s1 + $0x90] sm:$0xf]
  %v934 = vld [vmem:[%s1 + $0x94] sm:$0xf]
  %v935 = vld [vmem:[%s1 + $0x98] sm:$0xf]
  %v936 = vld [vmem:[%s1 + $0x9c] sm:$0xf]
  %v937 = vld [vmem:[%s1 + $0xa0] sm:$0xf]
  %v938 = vld [vmem:[%s1 + $0xa4] sm:$0xf]
  %v947 = vunpack.c.l.b16 %v931
  %v948 = vunpack.c.l.b16 %v932
  %v949 = vunpack.c.l.b16 %v933
  %v950 = vunpack.c.l.b16 %v934
  %v951 = vunpack.c.l.b16 %v935
  %v952 = vunpack.c.l.b16 %v936
  %v953 = vunpack.c.l.b16 %v937
  %v954 = vunpack.c.l.b16 %v938
  %v955 = vpack.c.b16 %v948, %v947
  %v956 = vpack.c.b16 %v950, %v949
  %v957 = vpack.c.b16 %v952, %v951
  %v958 = vpack.c.b16 %v954, %v953
  %vm963 = vcmask 523264
  %v965 = vsel %vm963, %v929, 0
  %v968 = vsel %vm963, %v930, 0
  %970 = vmatprep.subr.bf16.mxu0 0
  %971 = vmatpush1.bf16.msra.mxu0 %v955
  %972 = vmatprep.subr.bf16.mxu0 0
  %973 = vmatpush1.bf16.msra.mxu0 %v956
  %974 = vmatprep.subr.bf16.mxu0 0
  %975 = vmatpush1.bf16.msra.mxu0 %v957
  %976 = vmatprep.subr.bf16.mxu0 0
  %977 = vmatpush1.bf16.msra.mxu0 %v958
  %978 = vmatprep.subr.bf16.mxu0 0
  %979 = vmatpush1.bf16.msra.mxu0 0
  %980 = vmatprep.subr.bf16.mxu0 0
  %981 = vmatpush1.bf16.msra.mxu0 0
  %982 = vmatprep.subr.bf16.mxu0 0
  %983 = vmatpush1.bf16.msra.mxu0 0
  %984 = vmatprep.subr.bf16.mxu0 0
  %985 = vmatpush1.bf16.msra.mxu0 0
  %986 = vmatprep.subr.bf16.mxu0 0
  %987 = vmatpush1.bf16.msra.mxu0 0
  %988 = vmatprep.subr.bf16.mxu0 0
  %989 = vmatpush1.bf16.msra.mxu0 0
  %990 = vmatprep.subr.bf16.mxu0 0
  %991 = vmatpush1.bf16.msra.mxu0 0
  %992 = vmatprep.subr.bf16.mxu0 0
  %993 = vmatpush1.bf16.msra.mxu0 0
  %994 = vmatprep.subr.bf16.mxu0 0
  %995 = vmatpush1.bf16.msra.mxu0 0
  %996 = vmatprep.subr.bf16.mxu0 0
  %997 = vmatpush1.bf16.msra.mxu0 0
  %998 = vmatprep.subr.bf16.mxu0 0
  %999 = vmatpush1.bf16.msra.mxu0 0
  %1000 = vmatprep.subr.bf16.mxu0 0
  %1001 = vmatpush1.bf16.msra.mxu0 0
  %1002 = vmatprep.mubr.bf16.mxu0 0
  %1003 = vmatmul.mubr.bf16.gmra.mrb[0].mxu0 %v965
  %v1004 = vpop.f32.mrb[0].mxu0
  %v1005 = vadd.f32 0.0, %v1004
  %v1006 = vpop.f32.mrb[0].mxu0
  %v1007 = vpop.f32.mrb[0].mxu0
  %v1008 = vadd.f32 0.0, %v1007
  %v1009 = vpop.f32.mrb[0].mxu0
  %1010 = vmatprep.mubr.bf16.mxu0 0
  %1011 = vmatmul.mubr.bf16.gmra.mrb[0].mxu0 %v968
  %v1012 = vpop.f32.mrb[0].mxu0
  %v1013 = vadd.f32 0.0, %v1012
  %v1014 = vpop.f32.mrb[0].mxu0
  %v1015 = vpop.f32.mrb[0].mxu0
  %v1016 = vadd.f32 0.0, %v1015
  %v1017 = vpop.f32.mrb[0].mxu0
  %1018 = vdwg.mxu0
  %v1019 = vadd.f32 %v709, %v1005
  %v1020 = vadd.f32 %v710, %v1008
  %v1021 = vadd.f32 %v711, %v1013
  %v1022 = vadd.f32 %v712, %v1016
  %v1023 = vld [vmem:[%s2 + $0x6] sm:$0x1]
  %v1024 = vlaneseq
  %v1025 = vshrl.u32 %v1024, 7
  %v1026 = vsub.s32 0, %v1025
  %v1027 = vrot.slane %v1023, %v1026
  %v1028 = vadd.f32 %v1019, %v1027
  %v1029 = vadd.f32 %v1020, %v1027
  %v1030 = vadd.f32 %v1021, %v1027
  %v1031 = vadd.f32 %v1022, %v1027
  %v1032 = vmul.u32 %v22, 8
  %v1033 = vadd.s32 %v1032, 7
  %vm1034 = vcmp.eq.s32.totalorder %v20, %v1033
  %v1035 = vsel %vm1034, 1.0, 0.0
  %v1037 = vsel %vm162, %v1035, 0
  %1039 = vmatprep.subr.mxu0 0.0
  %1040 = vmatpush1.msra.mxu0 %v1028
  %1041 = vmatprep.subr.mxu0 0.0
  %1042 = vmatpush1.msra.mxu0 %v1029
  %1043 = vmatprep.subr.mxu0 0.0
  %1044 = vmatpush1.msra.mxu0 %v1030
  %1045 = vmatprep.subr.mxu0 0.0
  %1046 = vmatpush1.msra.mxu0 %v1031
  %1047 = vmatprep.subr.mxu0 0.0
  %1048 = vmatpush1.msra.mxu0 0.0
  %1049 = vmatprep.subr.mxu0 0.0
  %1050 = vmatpush1.msra.mxu0 0.0
  %1051 = vmatprep.subr.mxu0 0.0
  %1052 = vmatpush1.msra.mxu0 0.0
  %1053 = vmatprep.subr.mxu0 0.0
  %1054 = vmatpush1.msra.mxu0 0.0
  %1055 = vmatprep.subr.mxu0 0.0
  %1056 = vmatpush1.msra.mxu0 0.0
  %1057 = vmatprep.subr.mxu0 0.0
  %1058 = vmatpush1.msra.mxu0 0.0
  %1059 = vmatprep.subr.mxu0 0.0
  %1060 = vmatpush1.msra.mxu0 0.0
  %1061 = vmatprep.subr.mxu0 0.0
  %1062 = vmatpush1.msra.mxu0 0.0
  %1063 = vmatprep.subr.mxu0 0.0
  %1064 = vmatpush1.msra.mxu0 0.0
  %1065 = vmatprep.subr.mxu0 0.0
  %1066 = vmatpush1.msra.mxu0 0.0
  %1067 = vmatprep.subr.mxu0 0.0
  %1068 = vmatpush1.msra.mxu0 0.0
  %1069 = vmatprep.subr.mxu0 0.0
  %1070 = vmatpush1.msra.mxu0 0.0
  %1071 = vmatprep.subr.mxu0 0.0
  %1072 = vmatpush1.msra.mxu0 0.0
  %1073 = vmatprep.subr.mxu0 0.0
  %1074 = vmatpush1.msra.mxu0 0.0
  %1075 = vmatprep.subr.mxu0 0.0
  %1076 = vmatpush1.msra.mxu0 0.0
  %1077 = vmatprep.subr.mxu0 0.0
  %1078 = vmatpush1.msra.mxu0 0.0
  %1079 = vmatprep.subr.mxu0 0.0
  %1080 = vmatpush1.msra.mxu0 0.0
  %1081 = vmatprep.subr.mxu0 0.0
  %1082 = vmatpush1.msra.mxu0 0.0
  %1083 = vmatprep.subr.mxu0 0.0
  %1084 = vmatpush1.msra.mxu0 0.0
  %1085 = vmatprep.subr.mxu0 0.0
  %1086 = vmatpush1.msra.mxu0 0.0
  %1087 = vmatprep.subr.mxu0 0.0
  %1088 = vmatpush1.msra.mxu0 0.0
  %1089 = vmatprep.subr.mxu0 0.0
  %1090 = vmatpush1.msra.mxu0 0.0
  %1091 = vmatprep.subr.mxu0 0.0
  %1092 = vmatpush1.msra.mxu0 0.0
  %1093 = vmatprep.subr.mxu0 0.0
  %1094 = vmatpush1.msra.mxu0 0.0
  %1095 = vmatprep.subr.mxu0 0.0
  %1096 = vmatpush1.msra.mxu0 0.0
  %1097 = vmatprep.subr.mxu0 0.0
  %1098 = vmatpush1.msra.mxu0 0.0
  %1099 = vmatprep.subr.mxu0 0.0
  %1100 = vmatpush1.msra.mxu0 0.0
  %1101 = vmatprep.subr.mxu0 0.0
  %1102 = vmatpush1.msra.mxu0 0.0
  %1103 = vmatprep.mubr.f32.mxu0 0.0
  %1104 = vmatmul.mubr.f32.gmra.mrb[0].mxu0 %v1037
  %v1105 = vpop.f32.mrb[0].mxu0
  %v1106 = vadd.f32 0.0, %v1105
  %v1107 = vpop.f32.mrb[0].mxu0
  %1108 = vdwg.mxu0
  %v1109 = vld [vmem:[%s2 + $0x4] sm:$0x1]
  %v1110 = vld [vmem:[%s2 + $0x5] sm:$0x1]
  %vm1111 = vcmask 257024
  %v1112 = vsel %vm1111, %v1106, 0.0
  %1113 = vadd.xlane.f32.xlu0 %v1112
  %v1114 = vpop.xlane.xlu0 %1113
  %v1115 = vmul.f32 %v1114, %v175
  %v1116 = vmul.f32 %v1106, %v1106
  %v1117 = vsel %vm1111, %v1116, 0.0
  %1118 = vadd.xlane.f32.xlu0 %v1117
  %v1119 = vpop.xlane.xlu0 %1118
  %v1120 = vmul.f32 %v1119, %v175
  %v1121 = vmul.f32 %v1115, %v1115
  %v1122 = vsub.f32 %v1120, %v1121
  %v1123 = vsub.f32 %v1106, %v1115
  %v1124 = vadd.f32 %v1122, 1e-05
  %v1125 = vrsqrt.pop %v1124
  %v1126 = vmul.f32 %v1123, %v1125
  %v1127 = vlaneseq
  %v1128 = vshrl.u32 %v1127, 7
  %v1129 = vsub.s32 0, %v1128
  %v1130 = vrot.slane %v1109, %v1129
  %v1131 = vmul.f32 %v1126, %v1130
  %v1132 = vlaneseq
  %v1133 = vshrl.u32 %v1132, 7
  %v1134 = vsub.s32 0, %v1133
  %v1135 = vrot.slane %v1110, %v1134
  %v1136 = vadd.f32 %v1131, %v1135
  %v1137 = vld [vmem:[%s2 + $0x7] sm:$0x1]
  %v1138 = vld [vmem:[%s2 + $0x9] sm:$0x1]
  %1140 = vset.pattern.permute.xlu0 0
  %1141 = vperm.xlu0 %1140, %v1138
  %v1142 = vpop.permute.xlu0 %1141
  %v1145 = vsel %vm162, %v1137, 0
  %v1148 = vsel %vm162, %v1136, 0
  %1150 = vmatprep.subr.mxu0 0.0
  %1151 = vmatpush1.xpose.msra.mxu0 %v1148
  %1152 = vmatprep.subr.mxu0 0.0
  %1153 = vmatpush1.xpose.msra.mxu0 0.0
  %1154 = vmatprep.subr.mxu0 0.0
  %1155 = vmatpush1.xpose.msra.mxu0 0.0
  %1156 = vmatprep.subr.mxu0 0.0
  %1157 = vmatpush1.xpose.msra.mxu0 0.0
  %1158 = vmatprep.subr.mxu0 0.0
  %1159 = vmatpush1.xpose.msra.mxu0 0.0
  %1160 = vmatprep.subr.mxu0 0.0
  %1161 = vmatpush1.xpose.msra.mxu0 0.0
  %1162 = vmatprep.subr.mxu0 0.0
  %1163 = vmatpush1.xpose.msra.mxu0 0.0
  %1164 = vmatprep.subr.mxu0 0.0
  %1165 = vmatpush1.xpose.msra.mxu0 0.0
  %1166 = vmatprep.subr.mxu0 0.0
  %1167 = vmatpush1.xpose.msra.mxu0 0.0
  %1168 = vmatprep.subr.mxu0 0.0
  %1169 = vmatpush1.xpose.msra.mxu0 0.0
  %1170 = vmatprep.subr.mxu0 0.0
  %1171 = vmatpush1.xpose.msra.mxu0 0.0
  %1172 = vmatprep.subr.mxu0 0.0
  %1173 = vmatpush1.xpose.msra.mxu0 0.0
  %1174 = vmatprep.subr.mxu0 0.0
  %1175 = vmatpush1.xpose.msra.mxu0 0.0
  %1176 = vmatprep.subr.mxu0 0.0
  %1177 = vmatpush1.xpose.msra.mxu0 0.0
  %1178 = vmatprep.subr.mxu0 0.0
  %1179 = vmatpush1.xpose.msra.mxu0 0.0
  %1180 = vmatprep.subr.mxu0 0.0
  %1181 = vmatpush1.xpose.msra.mxu0 0.0
  %1182 = vmatprep.subr.mxu0 0.0
  %1183 = vmatpush1.xpose.msra.mxu0 0.0
  %1184 = vmatprep.subr.mxu0 0.0
  %1185 = vmatpush1.xpose.msra.mxu0 0.0
  %1186 = vmatprep.subr.mxu0 0.0
  %1187 = vmatpush1.xpose.msra.mxu0 0.0
  %1188 = vmatprep.subr.mxu0 0.0
  %1189 = vmatpush1.xpose.msra.mxu0 0.0
  %1190 = vmatprep.subr.mxu0 0.0
  %1191 = vmatpush1.xpose.msra.mxu0 0.0
  %1192 = vmatprep.subr.mxu0 0.0
  %1193 = vmatpush1.xpose.msra.mxu0 0.0
  %1194 = vmatprep.subr.mxu0 0.0
  %1195 = vmatpush1.xpose.msra.mxu0 0.0
  %1196 = vmatprep.subr.mxu0 0.0
  %1197 = vmatpush1.xpose.msra.mxu0 0.0
  %1198 = vmatprep.subr.mxu0 0.0
  %1199 = vmatpush1.xpose.msra.mxu0 0.0
  %1200 = vmatprep.subr.mxu0 0.0
  %1201 = vmatpush1.xpose.msra.mxu0 0.0
  %1202 = vmatprep.subr.mxu0 0.0
  %1203 = vmatpush1.xpose.msra.mxu0 0.0
  %1204 = vmatprep.subr.mxu0 0.0
  %1205 = vmatpush1.xpose.msra.mxu0 0.0
  %1206 = vmatprep.subr.mxu0 0.0
  %1207 = vmatpush1.xpose.msra.mxu0 0.0
  %1208 = vmatprep.subr.mxu0 0.0
  %1209 = vmatpush1.xpose.msra.mxu0 0.0
  %1210 = vmatprep.subr.mxu0 0.0
  %1211 = vmatpush1.xpose.msra.mxu0 0.0
  %1212 = vmatprep.subr.mxu0 0.0
  %1213 = vmatpush1.xpose.msra.mxu0 0.0
  %1214 = vmatprep.mubr.f32.mxu0 0.0
  %1215 = vmatmul.mubr.f32.gmra.mrb[0].mxu0 %v1145
  %v1216 = vpop.f32.mrb[0].mxu0
  %v1217 = vadd.f32 %v1142, %v1216
  %v1218 = vpop.f32.mrb[0].mxu0
  %1219 = vdwg.mxu0
  %v1220 = vtanh.pop %v1217
  %vm1221 = vcmask 24576
  %1222 = vst.msk [vmem:[%s3] sm:$0x1] %vm1221, %v1220
  // Predicated region
  $region14: #{reward_model_forward.1} parent=0 // pred_check
    _
  $region15: #{reward_model_forward.1} parent=0 // pred_check_branch
    %1224 = sbr.rel (0) target = $region17
  $region16: #{reward_model_forward.1} parent=0 // pred_region
    _
  $region17: #{reward_model_forward.1} parent=0 // pred_fallthru
    _
  // Predicated region
  $region18: #{reward_model_forward.1} parent=0 // pred_check
    _
  $region19: #{reward_model_forward.1} parent=0 // pred_check_branch
    %1226 = sbr.rel (0) target = $region21
  $region20: #{reward_model_forward.1} parent=0 // pred_region
    _
  $region21: #{reward_model_forward.1} parent=0 // pred_fallthru
    _

</llo_original>
